<compile_context>
chip_gen: v6e
topology: v6e:2x2x1
jax: 0.10.0
libtpu: 0.0.40
codegen_flags: <defaults>
</compile_context>

<pallas_src>
import functools

import numpy as np
import jax
import jax.numpy as jnp
from jax.experimental import pallas as pl
from jax.experimental.pallas import tpu as pltpu


def _round_up(v, m):
    return -(-v // m) * m


def _mahalanobis_mask_kernel(x_ref, basis_ref, at_ref, thr_ref, out_ref,
                             pad_ref, *, c):
    # x_ref:     (bpb*Cp, L)    f32  bpb batches' channel rows stacked (Cp = pad8(C))
    # basis_ref: (L, 2*Fp)      f32  [cos | 0 | -sin | 0], Fp = pad128(F)
    # at_ref:    (Fp, Fp)       f32  (sqrt(softmax(w)) * A_full)^T, zero-padded
    # thr_ref:   (bpb, Cp, Cl)  f32  sigmoid((g1 - g0)/2), Cl = pad128(C)
    # out_ref:   (bpb, Cp, Cl)  f32  lane-dense mask slab
    # pad_ref:   (Cl, Fp)       f32  VMEM scratch: lane-padded Gram RHS
    bpb, cp, cl = thr_ref.shape
    fp = at_ref.shape[0]

    # |rfft(X)| for all bpb*Cp stacked rows in one real-DFT matmul.  Each half
    # of the basis is lane-padded to Fp (multiple of 128), so the re/im split
    # is an aligned, free view.
    y2 = jnp.dot(x_ref[...], basis_ref[...],
                 preferred_element_type=jnp.float32)          # (R, 2Fp)
    re = y2[:, :fp]
    im = y2[:, fp:]
    xf = jnp.sqrt(re * re + im * im)                          # (R, Fp) f32

    # ys = |XF| @ (sqrt(softmax(w)) * A_full)^T ; pairwise distance becomes a
    # Gram matrix: dist[x,c] = q_x + q_c - 2*(ys ys^T)[x,c].  Kept in f32
    # (latency-bound matmuls; avoids bf16 cancellation noise in dist).
    ys = jnp.dot(xf, at_ref[...], preferred_element_type=jnp.float32)  # (R, Fp)
    # Squared norms hoisted out of the per-batch loop, computed once in f32.
    q = jnp.sum(ys * ys, axis=-1, keepdims=True)              # (R, 1)

    # Shared lane-padded Gram RHS buffer: rows [cp, Cl) stay zero, rows [0, cp)
    # are overwritten per batch.  Re-zeroed every grid step (megacore-safe).
    pad_ref[...] = jnp.zeros_like(pad_ref)

    # Static (Cp, Cl) masks.
    row_id = jax.lax.broadcasted_iota(jnp.int32, (cp, cl), 0)
    col_id = jax.lax.broadcasted_iota(jnp.int32, (cp, cl), 1)
    diag = row_id == col_id
    diag_f = diag.astype(jnp.float32)
    # Valid off-diagonal columns only (matches the reference, which zeroes the
    # diagonal of exp_dist *before* taking the row max); columns >= C are the
    # lane padding and must not contribute to the max.
    offd_f = jnp.logical_and(col_id < c, jnp.logical_not(diag)).astype(jnp.float32)

    # Static loop: the wrapper keeps bpb*Cp <= ~128 rows so the live values
    # (ys, q) stay small; for much larger packings switch to lax.fori_loop
    # over a VMEM scratch to bound live ranges.
    for bi in range(bpb):
        ysb = ys[bi * cp:(bi + 1) * cp, :]                    # (Cp, Fp)
        q_col = q[bi * cp:(bi + 1) * cp, :]                   # (Cp, 1)

        # Lane-padded RHS -> Gram comes out (Cp, Cl): everything downstream is
        # lane-dense and the final store is an unmasked (Cp, 128) store.
        pad_ref[pl.ds(0, cp), :] = ysb
        g = jax.lax.dot_general(
            ysb, pad_ref[...],
            dimension_numbers=(((1,), (1,)), ((), ())),
            preferred_element_type=jnp.float32)               # (Cp, Cl)

        # q along the lane axis read off the f32 Gram diagonal (one sublane
        # reduction per batch).
        q_row = jnp.sum(jnp.where(diag, g, 0.0), axis=0, keepdims=True)  # (1, Cl)

        dist = jnp.maximum(q_col + q_row - 2.0 * g, 0.0)      # clamp fp cancellation
        # exp_dist = 1/(dist + 1e-10) on valid off-diagonal entries only.
        exp_dist = pl.reciprocal(dist + 1e-10, approx=True) * offd_f
        exp_max = jnp.max(exp_dist, axis=-1, keepdims=True)   # (Cp, 1)
        p = (exp_dist * pl.reciprocal(exp_max, approx=True) + diag_f) * 0.99

        # Hard two-class Gumbel-softmax (tau=1), class-0 indicator:
        #   1{log(p/(1-p)) + g0 >= log((1-p)/p) + g1}  ==  1{p >= sigmoid((g1-g0)/2)}
        # with the sigmoid threshold precomputed host-side.
        out_ref[bi] = (p >= thr_ref[bi]).astype(out_ref.dtype)


def _pick_batches_per_block(b, cp, rows_target=128):
    # The grid is a serial loop on one TensorCore: fewer, fatter steps amortize
    # the ~0.35us/step overhead and fill the MXU row dimension.  Keep the
    # per-step row count <= ~128 so the static per-batch loop does not spill;
    # a multi-step grid (split across v7x's two cores via "parallel") only
    # appears when there is enough work per step.
    bpb = 1
    for d in range(1, b + 1):
        if b % d == 0 and d * cp <= max(cp, rows_target):
            bpb = d
    return bpb


def pyramid_mahalanobis_mask(x_padded, basis, a_ts_pad, thresh, channel_count):
    """x_padded: (B, Cp, L) f32, channels zero-padded to a multiple of 8 (pad
    once, outside the per-call hot path); basis: (L, 2*Fp); a_ts_pad: (Fp, Fp);
    thresh: (B, Cp, Cl) host-side sigmoid((g1-g0)/2).  Returns (B, 1, C, C)."""
    b, cp, l = x_padded.shape
    fp = a_ts_pad.shape[0]
    cl = thresh.shape[-1]
    c = channel_count
    assert cp % 8 == 0 and cp >= c
    assert cl % 128 == 0 and cl >= c
    assert fp % 128 == 0 and basis.shape == (l, 2 * fp)
    assert thresh.shape == (b, cp, cl)

    bpb = _pick_batches_per_block(b, cp)
    grid = (b // bpb,)

    # Contiguous (B, Cp, L) -> (B*Cp, L) merge is metadata-only (no HBM pass).
    x2 = x_padded.reshape(b * cp, l)

    kernel = functools.partial(_mahalanobis_mask_kernel, c=c)
    out = pl.pallas_call(
        kernel,
        out_shape=jax.ShapeDtypeStruct((b, cp, cl), jnp.float32),
        grid_spec=pltpu.PrefetchScalarGridSpec(
            num_scalar_prefetch=0,
            grid=grid,
            in_specs=[
                pl.BlockSpec((bpb * cp, l), lambda i: (i, 0)),      # stacked X rows
                # basis / A^T are grid-invariant (constant index map, re-used
                # across steps).  For large L, tile the 2F axis and set
                # vmem_limit_bytes explicitly (v7x has half the VMEM of v6e).
                pl.BlockSpec((l, 2 * fp), lambda i: (0, 0)),        # real-DFT basis
                pl.BlockSpec((fp, fp), lambda i: (0, 0)),           # weighted A_full^T
                pl.BlockSpec((bpb, cp, cl), lambda i: (i, 0, 0)),   # sigmoid threshold
            ],
            out_specs=pl.BlockSpec((bpb, cp, cl), lambda i: (i, 0, 0)),
            scratch_shapes=[pltpu.VMEM((cl, fp), jnp.float32)],     # Gram RHS pad
        ),
        compiler_params=pltpu.CompilerParams(
            dimension_semantics=("parallel",)),
    )(x2, basis, a_ts_pad, thresh)

    return out[:, None, :c, :c]


def make_dft_basis(l, f_pad):
    """Real-DFT basis [cos(2*pi*n*k/L) | pad | -sin(2*pi*n*k/L) | pad], each
    half lane-padded to f_pad columns so the in-kernel re/im split is aligned."""
    f = l // 2 + 1
    n = np.arange(l)[:, None].astype(np.float64)
    k = np.arange(f)[None, :].astype(np.float64)
    ang = 2.0 * np.pi * n * k / l
    basis = np.zeros((l, 2 * f_pad), np.float32)
    basis[:, :f] = np.cos(ang)
    basis[:, f_pad:f_pad + f] = -np.sin(ang)
    return jnp.asarray(basis)


def make_params(input_size, num_bands, key, f_pad):
    """Mirror the module's __init__: per-band A matrices + softmax fusion
    weights, folded into one weighted, transposed, zero-padded block-diagonal
    matrix (sqrt(softmax(w)) scaled into the rows of A_full)."""
    f = input_size // 2 + 1
    band = f // num_bands
    band_sizes = [band] * (num_bands - 1) + [f - band * (num_bands - 1)]
    keys = jax.random.split(key, num_bands)
    a_bands = [jax.random.normal(keys[i], (s, s), jnp.float32)
               for i, s in enumerate(band_sizes)]
    fusion_weights = jnp.ones((num_bands,), jnp.float32)
    w = jax.nn.softmax(fusion_weights)

    a_full = jnp.zeros((f, f), jnp.float32)
    w_rows = []
    off = 0
    for i, (a, s) in enumerate(zip(a_bands, band_sizes)):
        a_full = a_full.at[off:off + s, off:off + s].set(a)
        w_rows.append(jnp.full((s,), w[i], jnp.float32))
        off += s
    w_freq = jnp.concatenate(w_rows)
    a_ts = (a_full * jnp.sqrt(w_freq)[:, None]).T             # (F, F)
    return jnp.zeros((f_pad, f_pad), jnp.float32).at[:f, :f].set(a_ts)


if __name__ == "__main__":
    input_size = 16      # L -> frequency_size F = 9
    num_bands = 3        # band_sizes = [3, 3, 3]
    batch = 4
    channels = 22        # module default channel_count

    L = input_size
    F = L // 2 + 1
    FP = _round_up(F, 128)          # lane-padded frequency axis
    CP = _round_up(channels, 8)     # sublane-padded channel rows
    CL = _round_up(channels, 128)   # lane-padded channel columns / output slab

    key = jax.random.PRNGKey(0)
    k_x, k_a, kg0, kg1 = jax.random.split(key, 4)

    x = jax.random.normal(k_x, (batch, channels, L), jnp.float32)
    # Store X channel-padded once (outside the per-call hot path).
    x_padded = jnp.pad(x, ((0, 0), (0, CP - channels), (0, 0)))

    a_ts_pad = make_params(L, num_bands, k_a, FP)   # (FP, FP)
    basis = make_dft_basis(L, FP)                   # (L, 2*FP)

    # Host-side Gumbel threshold, generated directly in the lane-padded layout
    # (no extra pad op): class-0 hard sample == p >= sigmoid((g1 - g0)/2).
    # TODO(synk): Gumbel noise is sampled host-side (jax.random.gumbel); an
    # in-kernel pltpu.prng_* path would also work but the RNG stream differs.
    g0 = jax.random.gumbel(kg0, (batch, CP, CL), jnp.float32)
    g1 = jax.random.gumbel(kg1, (batch, CP, CL), jnp.float32)
    thresh = jax.nn.sigmoid((g1 - g0) * 0.5)

    out = pyramid_mahalanobis_mask(x_padded, basis, a_ts_pad, thresh, channels)
    out = jax.block_until_ready(out)
    assert out.shape == (batch, 1, channels, channels)
    assert bool(jnp.all((out == 0.0) | (out == 1.0)))
    print("KERNEL_OK")
</pallas_src>

<mosaic_0001>
module attributes {stable_mosaic.version = 11 : i64} {
  func.func @_mahalanobis_mask_kernel(%arg0: i32, %arg1: memref<96x16xf32, #tpu.memory_space<vmem>>, %arg2: memref<16x256xf32, #tpu.memory_space<vmem>>, %arg3: memref<128x128xf32, #tpu.memory_space<vmem>>, %arg4: memref<4x24x128xf32, #tpu.memory_space<vmem>>, %arg5: memref<4x24x128xf32, #tpu.memory_space<vmem>>, %arg6: memref<128x128xf32, #tpu.memory_space<vmem>>) attributes {dimension_semantics = [#tpu.dimension_semantics<parallel>], iteration_bounds = array<i64: 1>, scalar_prefetch = 0 : i64, scratch_operands = 1 : i64, tpu.core_type = #tpu.core_type<tc>, window_params = [{transform_indices = @transform_0, window_bounds = array<i64: 96, 16>}, {pipeline_mode = #tpu.pipeline_mode<synchronous>, transform_indices = @transform_1, window_bounds = array<i64: 16, 256>}, {pipeline_mode = #tpu.pipeline_mode<synchronous>, transform_indices = @transform_2, window_bounds = array<i64: 128, 128>}, {transform_indices = @transform_3, window_bounds = array<i64: 4, 24, 128>}, {transform_indices = @transform_4, window_bounds = array<i64: 4, 24, 128>}]} {
    %c0 = arith.constant 0 : index
    %c0_0 = arith.constant 0 : index
    %0 = vector.load %arg1[%c0, %c0_0] : memref<96x16xf32, #tpu.memory_space<vmem>>, vector<96x16xf32>
    %c0_1 = arith.constant 0 : index
    %c0_2 = arith.constant 0 : index
    %1 = vector.load %arg2[%c0_1, %c0_2] : memref<16x256xf32, #tpu.memory_space<vmem>>, vector<16x256xf32>
    %cst = arith.constant dense<0.000000e+00> : vector<96x256xf32>
    %2 = tpu.matmul %0, %1, %cst {dimension_numbers = #tpu.dot_dimension_numbers<[1], [0], [0], [1], [0, 0, 1, 1], [], []>} : vector<96x16xf32>, vector<16x256xf32>, vector<96x256xf32> -> vector<96x256xf32>
    %3 = vector.extract_strided_slice %2 {offsets = [0, 0], sizes = [96, 128], strides = [1, 1]} : vector<96x256xf32> to vector<96x128xf32>
    %4 = vector.extract_strided_slice %2 {offsets = [0, 128], sizes = [96, 128], strides = [1, 1]} : vector<96x256xf32> to vector<96x128xf32>
    %5 = arith.mulf %3, %3 : vector<96x128xf32>
    %6 = arith.mulf %4, %4 : vector<96x128xf32>
    %7 = arith.addf %5, %6 : vector<96x128xf32>
    %8 = math.sqrt %7 : vector<96x128xf32>
    %c0_3 = arith.constant 0 : index
    %c0_4 = arith.constant 0 : index
    %9 = vector.load %arg3[%c0_3, %c0_4] : memref<128x128xf32, #tpu.memory_space<vmem>>, vector<128x128xf32>
    %cst_5 = arith.constant dense<0.000000e+00> : vector<96x128xf32>
    %10 = tpu.matmul %8, %9, %cst_5 {dimension_numbers = #tpu.dot_dimension_numbers<[1], [0], [0], [1], [0, 0, 1, 1], [], []>} : vector<96x128xf32>, vector<128x128xf32>, vector<96x128xf32> -> vector<96x128xf32>
    %11 = arith.mulf %10, %10 : vector<96x128xf32>
    %cst_6 = arith.constant dense<0.000000e+00> : vector<96xf32>
    %12 = vector.multi_reduction <add>, %11, %cst_6 [1] : vector<96x128xf32> to vector<96xf32>
    %13 = vector.shape_cast %12 : vector<96xf32> to vector<96x1xf32>
    %cst_7 = arith.constant 0.000000e+00 : f32
    %14 = vector.broadcast %cst_7 : f32 to vector<128x128xf32>
    %c0_8 = arith.constant 0 : index
    %c0_9 = arith.constant 0 : index
    %15 = vector.load %arg6[%c0_8, %c0_9] : memref<128x128xf32, #tpu.memory_space<vmem>>, vector<128x128xf32>
    tpu.vector_store %arg6[%c0_8, %c0_9], %14 {strides = array<i32>} : memref<128x128xf32, #tpu.memory_space<vmem>>, vector<128x128xf32>,
    %16 = tpu.iota {dimensions = array<i32: 0>} : vector<24x128xi32>
    %17 = tpu.iota {dimensions = array<i32: 1>} : vector<24x128xi32>
    %18 = arith.cmpi eq, %16, %17 : vector<24x128xi32>
    %19 = arith.extui %18 : vector<24x128xi1> to vector<24x128xi32>
    %20 = arith.sitofp %19 : vector<24x128xi32> to vector<24x128xf32>
    %c22_i32 = arith.constant 22 : i32
    %21 = vector.broadcast %c22_i32 : i32 to vector<24x128xi32>
    %22 = arith.cmpi slt, %17, %21 : vector<24x128xi32>
    %cst_10 = arith.constant dense<true> : vector<24x128xi1>
    %23 = arith.xori %18, %cst_10 : vector<24x128xi1>
    %24 = arith.andi %22, %23 : vector<24x128xi1>
    %25 = arith.extui %24 : vector<24x128xi1> to vector<24x128xi32>
    %26 = arith.sitofp %25 : vector<24x128xi32> to vector<24x128xf32>
    %27 = vector.extract_strided_slice %10 {offsets = [0, 0], sizes = [24, 128], strides = [1, 1]} : vector<96x128xf32> to vector<24x128xf32>
    %28 = vector.extract_strided_slice %13 {offsets = [0, 0], sizes = [24, 1], strides = [1, 1]} : vector<96x1xf32> to vector<24x1xf32>
    %c0_11 = arith.constant 0 : index
    %c0_12 = arith.constant 0 : index
    %29 = vector.load %arg6[%c0_11, %c0_12] : memref<128x128xf32, #tpu.memory_space<vmem>>, vector<24x128xf32>
    tpu.vector_store %arg6[%c0_11, %c0_12], %27 {strides = array<i32>} : memref<128x128xf32, #tpu.memory_space<vmem>>, vector<24x128xf32>,
    %c0_13 = arith.constant 0 : index
    %c0_14 = arith.constant 0 : index
    %30 = vector.load %arg6[%c0_13, %c0_14] : memref<128x128xf32, #tpu.memory_space<vmem>>, vector<128x128xf32>
    %cst_15 = arith.constant dense<0.000000e+00> : vector<24x128xf32>
    %31 = tpu.matmul %27, %30, %cst_15 {dimension_numbers = #tpu.dot_dimension_numbers<[1], [1], [0], [0], [0, 0, 1, 0], [], []>} : vector<24x128xf32>, vector<128x128xf32>, vector<24x128xf32> -> vector<24x128xf32>
    %cst_16 = arith.constant 0.000000e+00 : f32
    %32 = vector.broadcast %cst_16 : f32 to vector<24x128xf32>
    %33 = arith.select %18, %31, %32 : vector<24x128xi1>, vector<24x128xf32>
    %cst_17 = arith.constant dense<0.000000e+00> : vector<128xf32>
    %34 = vector.multi_reduction <add>, %33, %cst_17 [0] : vector<24x128xf32> to vector<128xf32>
    %35 = vector.shape_cast %34 : vector<128xf32> to vector<1x128xf32>
    %36 = vector.broadcast %28 : vector<24x1xf32> to vector<24x128xf32>
    %37 = vector.broadcast %35 : vector<1x128xf32> to vector<24x128xf32>
    %38 = arith.addf %36, %37 : vector<24x128xf32>
    %cst_18 = arith.constant 2.000000e+00 : f32
    %39 = vector.broadcast %cst_18 : f32 to vector<24x128xf32>
    %40 = arith.mulf %39, %31 : vector<24x128xf32>
    %41 = arith.subf %38, %40 : vector<24x128xf32>
    %cst_19 = arith.constant 0.000000e+00 : f32
    %42 = vector.broadcast %cst_19 : f32 to vector<24x128xf32>
    %43 = arith.maximumf %41, %42 : vector<24x128xf32>
    %cst_20 = arith.constant 1.000000e-10 : f32
    %44 = vector.broadcast %cst_20 : f32 to vector<24x128xf32>
    %45 = arith.addf %43, %44 : vector<24x128xf32>
    %46 = tpu.reciprocal %45 {approx = true} : vector<24x128xf32> -> vector<24x128xf32>
    %47 = arith.mulf %46, %26 : vector<24x128xf32>
    %cst_21 = arith.constant dense<0xFF800000> : vector<24xf32>
    %48 = vector.multi_reduction <maximumf>, %47, %cst_21 [1] : vector<24x128xf32> to vector<24xf32>
    %49 = vector.shape_cast %48 : vector<24xf32> to vector<24x1xf32>
    %50 = tpu.reciprocal %49 {approx = true} : vector<24x1xf32> -> vector<24x1xf32>
    %51 = vector.broadcast %50 : vector<24x1xf32> to vector<24x128xf32>
    %52 = arith.mulf %47, %51 : vector<24x128xf32>
    %53 = arith.addf %52, %20 : vector<24x128xf32>
    %cst_22 = arith.constant 9.900000e-01 : f32
    %54 = vector.broadcast %cst_22 : f32 to vector<24x128xf32>
    %55 = arith.mulf %53, %54 : vector<24x128xf32>
    %c0_23 = arith.constant 0 : index
    %c0_24 = arith.constant 0 : index
    %c0_25 = arith.constant 0 : index
    %56 = vector.load %arg4[%c0_23, %c0_24, %c0_25] : memref<4x24x128xf32, #tpu.memory_space<vmem>>, vector<1x24x128xf32>
    %57 = vector.shape_cast %56 : vector<1x24x128xf32> to vector<24x128xf32>
    %58 = arith.cmpf oge, %55, %57 : vector<24x128xf32>
    %59 = arith.extui %58 : vector<24x128xi1> to vector<24x128xi32>
    %60 = arith.sitofp %59 : vector<24x128xi32> to vector<24x128xf32>
    %c0_26 = arith.constant 0 : index
    %c0_27 = arith.constant 0 : index
    %c0_28 = arith.constant 0 : index
    %61 = vector.load %arg5[%c0_26, %c0_27, %c0_28] : memref<4x24x128xf32, #tpu.memory_space<vmem>>, vector<1x24x128xf32>
    %62 = vector.shape_cast %61 : vector<1x24x128xf32> to vector<24x128xf32>
    %63 = vector.shape_cast %60 : vector<24x128xf32> to vector<1x24x128xf32>
    tpu.vector_store %arg5[%c0_26, %c0_27, %c0_28], %63 {strides = array<i32>} : memref<4x24x128xf32, #tpu.memory_space<vmem>>, vector<1x24x128xf32>,
    %64 = vector.extract_strided_slice %10 {offsets = [24, 0], sizes = [24, 128], strides = [1, 1]} : vector<96x128xf32> to vector<24x128xf32>
    %65 = vector.extract_strided_slice %13 {offsets = [24, 0], sizes = [24, 1], strides = [1, 1]} : vector<96x1xf32> to vector<24x1xf32>
    %c0_29 = arith.constant 0 : index
    %c0_30 = arith.constant 0 : index
    %66 = vector.load %arg6[%c0_29, %c0_30] : memref<128x128xf32, #tpu.memory_space<vmem>>, vector<24x128xf32>
    tpu.vector_store %arg6[%c0_29, %c0_30], %64 {strides = array<i32>} : memref<128x128xf32, #tpu.memory_space<vmem>>, vector<24x128xf32>,
    %c0_31 = arith.constant 0 : index
    %c0_32 = arith.constant 0 : index
    %67 = vector.load %arg6[%c0_31, %c0_32] : memref<128x128xf32, #tpu.memory_space<vmem>>, vector<128x128xf32>
    %cst_33 = arith.constant dense<0.000000e+00> : vector<24x128xf32>
    %68 = tpu.matmul %64, %67, %cst_33 {dimension_numbers = #tpu.dot_dimension_numbers<[1], [1], [0], [0], [0, 0, 1, 0], [], []>} : vector<24x128xf32>, vector<128x128xf32>, vector<24x128xf32> -> vector<24x128xf32>
    %cst_34 = arith.constant 0.000000e+00 : f32
    %69 = vector.broadcast %cst_34 : f32 to vector<24x128xf32>
    %70 = arith.select %18, %68, %69 : vector<24x128xi1>, vector<24x128xf32>
    %cst_35 = arith.constant dense<0.000000e+00> : vector<128xf32>
    %71 = vector.multi_reduction <add>, %70, %cst_35 [0] : vector<24x128xf32> to vector<128xf32>
    %72 = vector.shape_cast %71 : vector<128xf32> to vector<1x128xf32>
    %73 = vector.broadcast %65 : vector<24x1xf32> to vector<24x128xf32>
    %74 = vector.broadcast %72 : vector<1x128xf32> to vector<24x128xf32>
    %75 = arith.addf %73, %74 : vector<24x128xf32>
    %cst_36 = arith.constant 2.000000e+00 : f32
    %76 = vector.broadcast %cst_36 : f32 to vector<24x128xf32>
    %77 = arith.mulf %76, %68 : vector<24x128xf32>
    %78 = arith.subf %75, %77 : vector<24x128xf32>
    %cst_37 = arith.constant 0.000000e+00 : f32
    %79 = vector.broadcast %cst_37 : f32 to vector<24x128xf32>
    %80 = arith.maximumf %78, %79 : vector<24x128xf32>
    %cst_38 = arith.constant 1.000000e-10 : f32
    %81 = vector.broadcast %cst_38 : f32 to vector<24x128xf32>
    %82 = arith.addf %80, %81 : vector<24x128xf32>
    %83 = tpu.reciprocal %82 {approx = true} : vector<24x128xf32> -> vector<24x128xf32>
    %84 = arith.mulf %83, %26 : vector<24x128xf32>
    %cst_39 = arith.constant dense<0xFF800000> : vector<24xf32>
    %85 = vector.multi_reduction <maximumf>, %84, %cst_39 [1] : vector<24x128xf32> to vector<24xf32>
    %86 = vector.shape_cast %85 : vector<24xf32> to vector<24x1xf32>
    %87 = tpu.reciprocal %86 {approx = true} : vector<24x1xf32> -> vector<24x1xf32>
    %88 = vector.broadcast %87 : vector<24x1xf32> to vector<24x128xf32>
    %89 = arith.mulf %84, %88 : vector<24x128xf32>
    %90 = arith.addf %89, %20 : vector<24x128xf32>
    %cst_40 = arith.constant 9.900000e-01 : f32
    %91 = vector.broadcast %cst_40 : f32 to vector<24x128xf32>
    %92 = arith.mulf %90, %91 : vector<24x128xf32>
    %c1 = arith.constant 1 : index
    %c0_41 = arith.constant 0 : index
    %c0_42 = arith.constant 0 : index
    %93 = vector.load %arg4[%c1, %c0_41, %c0_42] : memref<4x24x128xf32, #tpu.memory_space<vmem>>, vector<1x24x128xf32>
    %94 = vector.shape_cast %93 : vector<1x24x128xf32> to vector<24x128xf32>
    %95 = arith.cmpf oge, %92, %94 : vector<24x128xf32>
    %96 = arith.extui %95 : vector<24x128xi1> to vector<24x128xi32>
    %97 = arith.sitofp %96 : vector<24x128xi32> to vector<24x128xf32>
    %c1_43 = arith.constant 1 : index
    %c0_44 = arith.constant 0 : index
    %c0_45 = arith.constant 0 : index
    %98 = vector.load %arg5[%c1_43, %c0_44, %c0_45] : memref<4x24x128xf32, #tpu.memory_space<vmem>>, vector<1x24x128xf32>
    %99 = vector.shape_cast %98 : vector<1x24x128xf32> to vector<24x128xf32>
    %100 = vector.shape_cast %97 : vector<24x128xf32> to vector<1x24x128xf32>
    tpu.vector_store %arg5[%c1_43, %c0_44, %c0_45], %100 {strides = array<i32>} : memref<4x24x128xf32, #tpu.memory_space<vmem>>, vector<1x24x128xf32>,
    %101 = vector.extract_strided_slice %10 {offsets = [48, 0], sizes = [24, 128], strides = [1, 1]} : vector<96x128xf32> to vector<24x128xf32>
    %102 = vector.extract_strided_slice %13 {offsets = [48, 0], sizes = [24, 1], strides = [1, 1]} : vector<96x1xf32> to vector<24x1xf32>
    %c0_46 = arith.constant 0 : index
    %c0_47 = arith.constant 0 : index
    %103 = vector.load %arg6[%c0_46, %c0_47] : memref<128x128xf32, #tpu.memory_space<vmem>>, vector<24x128xf32>
    tpu.vector_store %arg6[%c0_46, %c0_47], %101 {strides = array<i32>} : memref<128x128xf32, #tpu.memory_space<vmem>>, vector<24x128xf32>,
    %c0_48 = arith.constant 0 : index
    %c0_49 = arith.constant 0 : index
    %104 = vector.load %arg6[%c0_48, %c0_49] : memref<128x128xf32, #tpu.memory_space<vmem>>, vector<128x128xf32>
    %cst_50 = arith.constant dense<0.000000e+00> : vector<24x128xf32>
    %105 = tpu.matmul %101, %104, %cst_50 {dimension_numbers = #tpu.dot_dimension_numbers<[1], [1], [0], [0], [0, 0, 1, 0], [], []>} : vector<24x128xf32>, vector<128x128xf32>, vector<24x128xf32> -> vector<24x128xf32>
    %cst_51 = arith.constant 0.000000e+00 : f32
    %106 = vector.broadcast %cst_51 : f32 to vector<24x128xf32>
    %107 = arith.select %18, %105, %106 : vector<24x128xi1>, vector<24x128xf32>
    %cst_52 = arith.constant dense<0.000000e+00> : vector<128xf32>
    %108 = vector.multi_reduction <add>, %107, %cst_52 [0] : vector<24x128xf32> to vector<128xf32>
    %109 = vector.shape_cast %108 : vector<128xf32> to vector<1x128xf32>
    %110 = vector.broadcast %102 : vector<24x1xf32> to vector<24x128xf32>
    %111 = vector.broadcast %109 : vector<1x128xf32> to vector<24x128xf32>
    %112 = arith.addf %110, %111 : vector<24x128xf32>
    %cst_53 = arith.constant 2.000000e+00 : f32
    %113 = vector.broadcast %cst_53 : f32 to vector<24x128xf32>
    %114 = arith.mulf %113, %105 : vector<24x128xf32>
    %115 = arith.subf %112, %114 : vector<24x128xf32>
    %cst_54 = arith.constant 0.000000e+00 : f32
    %116 = vector.broadcast %cst_54 : f32 to vector<24x128xf32>
    %117 = arith.maximumf %115, %116 : vector<24x128xf32>
    %cst_55 = arith.constant 1.000000e-10 : f32
    %118 = vector.broadcast %cst_55 : f32 to vector<24x128xf32>
    %119 = arith.addf %117, %118 : vector<24x128xf32>
    %120 = tpu.reciprocal %119 {approx = true} : vector<24x128xf32> -> vector<24x128xf32>
    %121 = arith.mulf %120, %26 : vector<24x128xf32>
    %cst_56 = arith.constant dense<0xFF800000> : vector<24xf32>
    %122 = vector.multi_reduction <maximumf>, %121, %cst_56 [1] : vector<24x128xf32> to vector<24xf32>
    %123 = vector.shape_cast %122 : vector<24xf32> to vector<24x1xf32>
    %124 = tpu.reciprocal %123 {approx = true} : vector<24x1xf32> -> vector<24x1xf32>
    %125 = vector.broadcast %124 : vector<24x1xf32> to vector<24x128xf32>
    %126 = arith.mulf %121, %125 : vector<24x128xf32>
    %127 = arith.addf %126, %20 : vector<24x128xf32>
    %cst_57 = arith.constant 9.900000e-01 : f32
    %128 = vector.broadcast %cst_57 : f32 to vector<24x128xf32>
    %129 = arith.mulf %127, %128 : vector<24x128xf32>
    %c2 = arith.constant 2 : index
    %c0_58 = arith.constant 0 : index
    %c0_59 = arith.constant 0 : index
    %130 = vector.load %arg4[%c2, %c0_58, %c0_59] : memref<4x24x128xf32, #tpu.memory_space<vmem>>, vector<1x24x128xf32>
    %131 = vector.shape_cast %130 : vector<1x24x128xf32> to vector<24x128xf32>
    %132 = arith.cmpf oge, %129, %131 : vector<24x128xf32>
    %133 = arith.extui %132 : vector<24x128xi1> to vector<24x128xi32>
    %134 = arith.sitofp %133 : vector<24x128xi32> to vector<24x128xf32>
    %c2_60 = arith.constant 2 : index
    %c0_61 = arith.constant 0 : index
    %c0_62 = arith.constant 0 : index
    %135 = vector.load %arg5[%c2_60, %c0_61, %c0_62] : memref<4x24x128xf32, #tpu.memory_space<vmem>>, vector<1x24x128xf32>
    %136 = vector.shape_cast %135 : vector<1x24x128xf32> to vector<24x128xf32>
    %137 = vector.shape_cast %134 : vector<24x128xf32> to vector<1x24x128xf32>
    tpu.vector_store %arg5[%c2_60, %c0_61, %c0_62], %137 {strides = array<i32>} : memref<4x24x128xf32, #tpu.memory_space<vmem>>, vector<1x24x128xf32>,
    %138 = vector.extract_strided_slice %10 {offsets = [72, 0], sizes = [24, 128], strides = [1, 1]} : vector<96x128xf32> to vector<24x128xf32>
    %139 = vector.extract_strided_slice %13 {offsets = [72, 0], sizes = [24, 1], strides = [1, 1]} : vector<96x1xf32> to vector<24x1xf32>
    %c0_63 = arith.constant 0 : index
    %c0_64 = arith.constant 0 : index
    %140 = vector.load %arg6[%c0_63, %c0_64] : memref<128x128xf32, #tpu.memory_space<vmem>>, vector<24x128xf32>
    tpu.vector_store %arg6[%c0_63, %c0_64], %138 {strides = array<i32>} : memref<128x128xf32, #tpu.memory_space<vmem>>, vector<24x128xf32>,
    %c0_65 = arith.constant 0 : index
    %c0_66 = arith.constant 0 : index
    %141 = vector.load %arg6[%c0_65, %c0_66] : memref<128x128xf32, #tpu.memory_space<vmem>>, vector<128x128xf32>
    %cst_67 = arith.constant dense<0.000000e+00> : vector<24x128xf32>
    %142 = tpu.matmul %138, %141, %cst_67 {dimension_numbers = #tpu.dot_dimension_numbers<[1], [1], [0], [0], [0, 0, 1, 0], [], []>} : vector<24x128xf32>, vector<128x128xf32>, vector<24x128xf32> -> vector<24x128xf32>
    %cst_68 = arith.constant 0.000000e+00 : f32
    %143 = vector.broadcast %cst_68 : f32 to vector<24x128xf32>
    %144 = arith.select %18, %142, %143 : vector<24x128xi1>, vector<24x128xf32>
    %cst_69 = arith.constant dense<0.000000e+00> : vector<128xf32>
    %145 = vector.multi_reduction <add>, %144, %cst_69 [0] : vector<24x128xf32> to vector<128xf32>
    %146 = vector.shape_cast %145 : vector<128xf32> to vector<1x128xf32>
    %147 = vector.broadcast %139 : vector<24x1xf32> to vector<24x128xf32>
    %148 = vector.broadcast %146 : vector<1x128xf32> to vector<24x128xf32>
    %149 = arith.addf %147, %148 : vector<24x128xf32>
    %cst_70 = arith.constant 2.000000e+00 : f32
    %150 = vector.broadcast %cst_70 : f32 to vector<24x128xf32>
    %151 = arith.mulf %150, %142 : vector<24x128xf32>
    %152 = arith.subf %149, %151 : vector<24x128xf32>
    %cst_71 = arith.constant 0.000000e+00 : f32
    %153 = vector.broadcast %cst_71 : f32 to vector<24x128xf32>
    %154 = arith.maximumf %152, %153 : vector<24x128xf32>
    %cst_72 = arith.constant 1.000000e-10 : f32
    %155 = vector.broadcast %cst_72 : f32 to vector<24x128xf32>
    %156 = arith.addf %154, %155 : vector<24x128xf32>
    %157 = tpu.reciprocal %156 {approx = true} : vector<24x128xf32> -> vector<24x128xf32>
    %158 = arith.mulf %157, %26 : vector<24x128xf32>
    %cst_73 = arith.constant dense<0xFF800000> : vector<24xf32>
    %159 = vector.multi_reduction <maximumf>, %158, %cst_73 [1] : vector<24x128xf32> to vector<24xf32>
    %160 = vector.shape_cast %159 : vector<24xf32> to vector<24x1xf32>
    %161 = tpu.reciprocal %160 {approx = true} : vector<24x1xf32> -> vector<24x1xf32>
    %162 = vector.broadcast %161 : vector<24x1xf32> to vector<24x128xf32>
    %163 = arith.mulf %158, %162 : vector<24x128xf32>
    %164 = arith.addf %163, %20 : vector<24x128xf32>
    %cst_74 = arith.constant 9.900000e-01 : f32
    %165 = vector.broadcast %cst_74 : f32 to vector<24x128xf32>
    %166 = arith.mulf %164, %165 : vector<24x128xf32>
    %c3 = arith.constant 3 : index
    %c0_75 = arith.constant 0 : index
    %c0_76 = arith.constant 0 : index
    %167 = vector.load %arg4[%c3, %c0_75, %c0_76] : memref<4x24x128xf32, #tpu.memory_space<vmem>>, vector<1x24x128xf32>
    %168 = vector.shape_cast %167 : vector<1x24x128xf32> to vector<24x128xf32>
    %169 = arith.cmpf oge, %166, %168 : vector<24x128xf32>
    %170 = arith.extui %169 : vector<24x128xi1> to vector<24x128xi32>
    %171 = arith.sitofp %170 : vector<24x128xi32> to vector<24x128xf32>
    %c3_77 = arith.constant 3 : index
    %c0_78 = arith.constant 0 : index
    %c0_79 = arith.constant 0 : index
    %172 = vector.load %arg5[%c3_77, %c0_78, %c0_79] : memref<4x24x128xf32, #tpu.memory_space<vmem>>, vector<1x24x128xf32>
    %173 = vector.shape_cast %172 : vector<1x24x128xf32> to vector<24x128xf32>
    %174 = vector.shape_cast %171 : vector<24x128xf32> to vector<1x24x128xf32>
    tpu.vector_store %arg5[%c3_77, %c0_78, %c0_79], %174 {strides = array<i32>} : memref<4x24x128xf32, #tpu.memory_space<vmem>>, vector<1x24x128xf32>,
    return
  }
  func.func @transform_0(%arg0: i32) -> (i32, i32) {
    %c0_i32 = arith.constant 0 : i32
    %c0_i32_0 = arith.constant 0 : i32
    return %arg0, %c0_i32 : i32, i32
  }
  func.func @transform_1(%arg0: i32) -> (i32, i32) {
    %c0_i32 = arith.constant 0 : i32
    %c0_i32_0 = arith.constant 0 : i32
    %c0_i32_1 = arith.constant 0 : i32
    return %c0_i32, %c0_i32_0 : i32, i32
  }
  func.func @transform_2(%arg0: i32) -> (i32, i32) {
    %c0_i32 = arith.constant 0 : i32
    %c0_i32_0 = arith.constant 0 : i32
    %c0_i32_1 = arith.constant 0 : i32
    return %c0_i32, %c0_i32_0 : i32, i32
  }
  func.func @transform_3(%arg0: i32) -> (i32, i32, i32) {
    %c0_i32 = arith.constant 0 : i32
    %c0_i32_0 = arith.constant 0 : i32
    %c0_i32_1 = arith.constant 0 : i32
    return %arg0, %c0_i32, %c0_i32_0 : i32, i32, i32
  }
  func.func @transform_4(%arg0: i32) -> (i32, i32, i32) {
    %c0_i32 = arith.constant 0 : i32
    %c0_i32_0 = arith.constant 0 : i32
    %c0_i32_1 = arith.constant 0 : i32
    return %arg0, %c0_i32, %c0_i32_0 : i32, i32, i32
  }
}

</mosaic_0001>

<llo_original>
// kernel: tpu_custom_call.1
$region0: #{tpu_custom_call.1}
  #allocation0 [shape = 'u32[]', space=smem, size = 0x4, offset = 0x4, fixed_abs, tag = 'smem constant byte address 0x4 - core index']
  #allocation1 [shape = 'u32[144,128]{1,0:T(1,128)}', space=vmem, size = 0x12000, scoped, tag = 'internal scratch']
  #allocation2 [shape = 'f32[128,128]{1,0:T(8,128)}', space=vmem, size = 0x10000, scoped, tag = 'scratch operand']
  %s0 = inlined_call_operand.vmem [shape: f32[96,16], index: 0, kind: input, shape index: {}]
  %s1 = inlined_call_operand.hbm [shape: f32[16,256], index: 1, kind: input, shape index: {}]
  %s2 = inlined_call_operand.hbm [shape: f32[128,128], index: 2, kind: input, shape index: {}]
  %s3 = inlined_call_operand.vmem [shape: f32[4,24,128], index: 3, kind: input, shape index: {}]
  %s4 = inlined_call_operand.hbm [shape: f32[4,24,128], index: 4, kind: output, shape index: {}]
  %s5 = sld [smem:[#allocation0]]
  $region34: #{tpu_custom_call.1} parent=0
    _
  %s7 = ssub.s32 1, %s5
  %s8 = scalar_select 0, %s7, %s5
  $region1: #{tpu_custom_call.1} parent=0
    #allocation3 [shape = 'u8[16384]{0}', space=vmem, size = 0x4000, scoped, tag = 'input window, operand 1, single buffered']
    #allocation4 [shape = 's32[1]{0}', space=sflag, size = 0x4, scoped, tag = 'scoped memory for tpu_custom_call.1']
    #allocation5 [shape = 's32[1]{0}', space=sflag, size = 0x4, scoped, tag = 'scoped memory for tpu_custom_call.1']
    #allocation6 [shape = 'u8[65536]{0}', space=vmem, size = 0x10000, scoped, tag = 'input window, operand 2, single buffered']
    #allocation7 [shape = 's32[1]{0}', space=sflag, size = 0x4, scoped, tag = 'scoped memory for tpu_custom_call.1']
    #allocation8 [shape = 'u8[49152]{0}', space=vmem, size = 0xc000, scoped, tag = 'output window, operand 0, single buffered']
    %9 = vsyncpa [#allocation4], 0
    %10 = vsyncpa [#allocation7], 0
    %11 = vsyncpa [#allocation5], 0
    // Predicated region
    $region2: #{tpu_custom_call.1} parent=1 // pred_check
      _
    $region3: #{tpu_custom_call.1} parent=1 // pred_check_branch
      %13 = sbr.rel (0) target = $region5
    $region4: #{tpu_custom_call.1} parent=1 // pred_region
      _
    $region5: #{tpu_custom_call.1} parent=1 // pred_fallthru
      _
    // Predicated region
    $region6: #{tpu_custom_call.1} parent=1 // pred_check
      _
    $region7: #{tpu_custom_call.1} parent=1 // pred_check_branch
      %15 = sbr.rel (0) target = $region9
    $region8: #{tpu_custom_call.1} parent=1 // pred_region
      %s17 = ssub.s32 512, 512
      %18 = vsyncadd [#allocation4], %s17
      %s19 = sshll.u32 [#allocation3], 4
      %s20 = int_to_ptr.vmem [resolvable:$true] %s19
      %25 = dma.hbm_to_vmem [thread:$0]  %s1, 512, %s20, [#allocation4], 256, 256, 16
    $region9: #{tpu_custom_call.1} parent=1 // pred_fallthru
      _
    // Predicated region
    $region10: #{tpu_custom_call.1} parent=1 // pred_check
      _
    $region11: #{tpu_custom_call.1} parent=1 // pred_check_branch
      %27 = sbr.rel (0) target = $region13
    $region12: #{tpu_custom_call.1} parent=1 // pred_region
      %s29 = ssub.s32 2048, 2048
      %30 = vsyncadd [#allocation7], %s29
      %s31 = sshll.u32 [#allocation6], 4
      %s32 = int_to_ptr.vmem [resolvable:$true] %s31
      %37 = dma.hbm_to_vmem [thread:$0]  %s2, 2048, %s32, [#allocation7], 128, 128, 8
    $region13: #{tpu_custom_call.1} parent=1 // pred_fallthru
      _
    // Predicated region
    $region14: #{tpu_custom_call.1} parent=1 // pred_check
      _
    $region15: #{tpu_custom_call.1} parent=1 // pred_check_branch
      %39 = sbr.rel (0) target = $region17
    $region16: #{tpu_custom_call.1} parent=1 // pred_region
      _
    $region17: #{tpu_custom_call.1} parent=1 // pred_fallthru
      _
    // Predicated region
    $region18: #{tpu_custom_call.1} parent=1 // pred_check
      _
    $region19: #{tpu_custom_call.1} parent=1 // pred_check_branch
      %41 = sbr.rel (0) target = $region21
    $region20: #{tpu_custom_call.1} parent=1 // pred_region
      %42 = dma.done [#allocation4], 512
    $region21: #{tpu_custom_call.1} parent=1 // pred_fallthru
      _
    // Predicated region
    $region22: #{tpu_custom_call.1} parent=1 // pred_check
      _
    $region23: #{tpu_custom_call.1} parent=1 // pred_check_branch
      %44 = sbr.rel (0) target = $region25
    $region24: #{tpu_custom_call.1} parent=1 // pred_region
      %45 = dma.done [#allocation7], 2048
    $region25: #{tpu_custom_call.1} parent=1 // pred_fallthru
      _
    %v46 = vld [vmem:[%s0] sm:$0xff]
    %v47 = vld [vmem:[%s0 + $0x8] sm:$0xff]
    %v48 = vld [vmem:[%s0 + $0x10] sm:$0xff]
    %v49 = vld [vmem:[%s0 + $0x18] sm:$0xff]
    %v50 = vld [vmem:[%s0 + $0x20] sm:$0xff]
    %v51 = vld [vmem:[%s0 + $0x28] sm:$0xff]
    %v52 = vld [vmem:[%s0 + $0x30] sm:$0xff]
    %v53 = vld [vmem:[%s0 + $0x38] sm:$0xff]
    %v54 = vld [vmem:[%s0 + $0x40] sm:$0xff]
    %v55 = vld [vmem:[%s0 + $0x48] sm:$0xff]
    %v56 = vld [vmem:[%s0 + $0x50] sm:$0xff]
    %v57 = vld [vmem:[%s0 + $0x58] sm:$0xff]
    %v58 = vld [vmem:[#allocation3] sm:$0xff]
    %v59 = vld [vmem:[#allocation3 + $0x8] sm:$0xff]
    %v60 = vld [vmem:[#allocation3 + $0x10] sm:$0xff]
    %v61 = vld [vmem:[#allocation3 + $0x18] sm:$0xff]
    %vm62 = vcmask 130048
    %v64 = vsel %vm62, %v46, 0
    %v67 = vsel %vm62, %v47, 0
    %v70 = vsel %vm62, %v48, 0
    %v73 = vsel %vm62, %v49, 0
    %v76 = vsel %vm62, %v50, 0
    %v79 = vsel %vm62, %v51, 0
    %v82 = vsel %vm62, %v52, 0
    %v85 = vsel %vm62, %v53, 0
    %v88 = vsel %vm62, %v54, 0
    %v91 = vsel %vm62, %v55, 0
    %v94 = vsel %vm62, %v56, 0
    %v97 = vsel %vm62, %v57, 0
    %99 = vmatprep.subr.mxu0 0.0
    %100 = vmatpush1.msra.mxu0 0.0
    %101 = vmatprep.subr.mxu0 0.0
    %102 = vmatpush1.msra.mxu0 0.0
    %103 = vmatprep.subr.mxu0 0.0
    %104 = vmatpush1.msra.mxu0 0.0
    %105 = vmatprep.subr.mxu0 0.0
    %106 = vmatpush1.msra.mxu0 0.0
    %107 = vmatprep.subr.mxu0 0.0
    %108 = vmatpush1.msra.mxu0 0.0
    %109 = vmatprep.subr.mxu0 0.0
    %110 = vmatpush1.msra.mxu0 0.0
    %111 = vmatprep.subr.mxu0 0.0
    %112 = vmatpush1.msra.mxu0 0.0
    %113 = vmatprep.subr.mxu0 0.0
    %114 = vmatpush1.msra.mxu0 0.0
    %115 = vmatprep.subr.mxu0 0.0
    %116 = vmatpush1.msra.mxu0 0.0
    %117 = vmatprep.subr.mxu0 0.0
    %118 = vmatpush1.msra.mxu0 0.0
    %119 = vmatprep.subr.mxu0 0.0
    %120 = vmatpush1.msra.mxu0 0.0
    %121 = vmatprep.subr.mxu0 0.0
    %122 = vmatpush1.msra.mxu0 0.0
    %123 = vmatprep.subr.mxu0 0.0
    %124 = vmatpush1.msra.mxu0 0.0
    %125 = vmatprep.subr.mxu0 0.0
    %126 = vmatpush1.msra.mxu0 0.0
    %127 = vmatprep.subr.mxu0 %v61
    %128 = vmatpush1.msra.mxu0 %v60
    %129 = vmatprep.subr.mxu0 %v59
    %130 = vmatpush1.msra.mxu0 %v58
    %131 = vmatprep.subr.mxu0 0.0
    %132 = vmatpush2.msra.mxu0 0.0
    %133 = vmatprep.subr.mxu0 0.0
    %134 = vmatpush2.msra.mxu0 0.0
    %135 = vmatprep.subr.mxu0 0.0
    %136 = vmatpush2.msra.mxu0 0.0
    %137 = vmatprep.subr.mxu0 0.0
    %138 = vmatpush2.msra.mxu0 0.0
    %139 = vmatprep.subr.mxu0 0.0
    %140 = vmatpush2.msra.mxu0 0.0
    %141 = vmatprep.subr.mxu0 0.0
    %142 = vmatpush2.msra.mxu0 0.0
    %143 = vmatprep.subr.mxu0 0.0
    %144 = vmatpush2.msra.mxu0 0.0
    %145 = vmatprep.subr.mxu0 0.0
    %146 = vmatpush2.msra.mxu0 0.0
    %147 = vmatprep.subr.mxu0 0.0
    %148 = vmatpush2.msra.mxu0 0.0
    %149 = vmatprep.subr.mxu0 0.0
    %150 = vmatpush2.msra.mxu0 0.0
    %151 = vmatprep.subr.mxu0 0.0
    %152 = vmatpush2.msra.mxu0 0.0
    %153 = vmatprep.subr.mxu0 0.0
    %154 = vmatpush2.msra.mxu0 0.0
    %155 = vmatprep.subr.mxu0 0.0
    %156 = vmatpush2.msra.mxu0 0.0
    %157 = vmatprep.subr.mxu0 0.0
    %158 = vmatpush2.msra.mxu0 0.0
    %159 = vmatprep.subr.mxu0 0.0
    %160 = vmatpush2.msra.mxu0 0.0
    %161 = vmatprep.subr.mxu0 0.0
    %162 = vmatpush2.msra.mxu0 0.0
    %163 = vmatprep.mubr.f32.mxu0 0.0
    %164 = vmatmul.mubr.f32.gmra.mxu0 %v64
    %v165 = vpop.f32.mrf.mxu0
    %v166 = vadd.f32 0.0, %v165
    %v167 = vpop.f32.mrf.mxu0
    %v168 = vadd.f32 0.0, %v167
    %169 = vmatprep.mubr.f32.mxu0 0.0
    %170 = vmatmul.mubr.f32.gmra.mxu0 %v67
    %v171 = vpop.f32.mrf.mxu0
    %v172 = vadd.f32 0.0, %v171
    %v173 = vpop.f32.mrf.mxu0
    %v174 = vadd.f32 0.0, %v173
    %175 = vmatprep.mubr.f32.mxu0 0.0
    %176 = vmatmul.mubr.f32.gmra.mxu0 %v70
    %v177 = vpop.f32.mrf.mxu0
    %v178 = vadd.f32 0.0, %v177
    %v179 = vpop.f32.mrf.mxu0
    %v180 = vadd.f32 0.0, %v179
    %181 = vmatprep.mubr.f32.mxu0 0.0
    %182 = vmatmul.mubr.f32.gmra.mxu0 %v73
    %v183 = vpop.f32.mrf.mxu0
    %v184 = vadd.f32 0.0, %v183
    %v185 = vpop.f32.mrf.mxu0
    %v186 = vadd.f32 0.0, %v185
    %187 = vmatprep.mubr.f32.mxu0 0.0
    %188 = vmatmul.mubr.f32.gmra.mxu0 %v76
    %v189 = vpop.f32.mrf.mxu0
    %v190 = vadd.f32 0.0, %v189
    %v191 = vpop.f32.mrf.mxu0
    %v192 = vadd.f32 0.0, %v191
    %193 = vmatprep.mubr.f32.mxu0 0.0
    %194 = vmatmul.mubr.f32.gmra.mxu0 %v79
    %v195 = vpop.f32.mrf.mxu0
    %v196 = vadd.f32 0.0, %v195
    %v197 = vpop.f32.mrf.mxu0
    %v198 = vadd.f32 0.0, %v197
    %199 = vmatprep.mubr.f32.mxu0 0.0
    %200 = vmatmul.mubr.f32.gmra.mxu0 %v82
    %v201 = vpop.f32.mrf.mxu0
    %v202 = vadd.f32 0.0, %v201
    %v203 = vpop.f32.mrf.mxu0
    %v204 = vadd.f32 0.0, %v203
    %205 = vmatprep.mubr.f32.mxu0 0.0
    %206 = vmatmul.mubr.f32.gmra.mxu0 %v85
    %v207 = vpop.f32.mrf.mxu0
    %v208 = vadd.f32 0.0, %v207
    %v209 = vpop.f32.mrf.mxu0
    %v210 = vadd.f32 0.0, %v209
    %211 = vmatprep.mubr.f32.mxu0 0.0
    %212 = vmatmul.mubr.f32.gmra.mxu0 %v88
    %v213 = vpop.f32.mrf.mxu0
    %v214 = vadd.f32 0.0, %v213
    %v215 = vpop.f32.mrf.mxu0
    %v216 = vadd.f32 0.0, %v215
    %217 = vmatprep.mubr.f32.mxu0 0.0
    %218 = vmatmul.mubr.f32.gmra.mxu0 %v91
    %v219 = vpop.f32.mrf.mxu0
    %v220 = vadd.f32 0.0, %v219
    %v221 = vpop.f32.mrf.mxu0
    %v222 = vadd.f32 0.0, %v221
    %223 = vmatprep.mubr.f32.mxu0 0.0
    %224 = vmatmul.mubr.f32.gmra.mxu0 %v94
    %v225 = vpop.f32.mrf.mxu0
    %v226 = vadd.f32 0.0, %v225
    %v227 = vpop.f32.mrf.mxu0
    %v228 = vadd.f32 0.0, %v227
    %229 = vmatprep.mubr.f32.mxu0 0.0
    %230 = vmatmul.mubr.f32.gmra.mxu0 %v97
    %v231 = vpop.f32.mrf.mxu0
    %v232 = vadd.f32 0.0, %v231
    %v233 = vpop.f32.mrf.mxu0
    %v234 = vadd.f32 0.0, %v233
    %235 = vdwg.mxu0
    %v236 = vmul.f32 %v166, %v166
    %v237 = vmul.f32 %v172, %v172
    %v238 = vmul.f32 %v178, %v178
    %v239 = vmul.f32 %v184, %v184
    %v240 = vmul.f32 %v190, %v190
    %v241 = vmul.f32 %v196, %v196
    %v242 = vmul.f32 %v202, %v202
    %v243 = vmul.f32 %v208, %v208
    %v244 = vmul.f32 %v214, %v214
    %v245 = vmul.f32 %v220, %v220
    %v246 = vmul.f32 %v226, %v226
    %v247 = vmul.f32 %v232, %v232
    %v248 = vmul.f32 %v168, %v168
    %v249 = vmul.f32 %v174, %v174
    %v250 = vmul.f32 %v180, %v180
    %v251 = vmul.f32 %v186, %v186
    %v252 = vmul.f32 %v192, %v192
    %v253 = vmul.f32 %v198, %v198
    %v254 = vmul.f32 %v204, %v204
    %v255 = vmul.f32 %v210, %v210
    %v256 = vmul.f32 %v216, %v216
    %v257 = vmul.f32 %v222, %v222
    %v258 = vmul.f32 %v228, %v228
    %v259 = vmul.f32 %v234, %v234
    %v260 = vadd.f32 %v236, %v248
    %v261 = vadd.f32 %v237, %v249
    %v262 = vadd.f32 %v238, %v250
    %v263 = vadd.f32 %v239, %v251
    %v264 = vadd.f32 %v240, %v252
    %v265 = vadd.f32 %v241, %v253
    %v266 = vadd.f32 %v242, %v254
    %v267 = vadd.f32 %v243, %v255
    %v268 = vadd.f32 %v244, %v256
    %v269 = vadd.f32 %v245, %v257
    %v270 = vadd.f32 %v246, %v258
    %v271 = vadd.f32 %v247, %v259
    %v272 = vrsqrt.pop %v260
    %v273 = vmul.f32 %v260, %v272
    %vm274 = vcmp.eq.f32.partialorder %v260, inf
    %v275 = vsel %vm274, %v260, %v273
    %vm276 = vcmp.eq.f32.partialorder %v260, 0.0
    %v277 = vand.u32 %v260, 2147483648
    %v278 = vsel %vm276, %v277, %v275
    %v279 = vrsqrt.pop %v261
    %v280 = vmul.f32 %v261, %v279
    %vm281 = vcmp.eq.f32.partialorder %v261, inf
    %v282 = vsel %vm281, %v261, %v280
    %vm283 = vcmp.eq.f32.partialorder %v261, 0.0
    %v284 = vand.u32 %v261, 2147483648
    %v285 = vsel %vm283, %v284, %v282
    %v286 = vrsqrt.pop %v262
    %v287 = vmul.f32 %v262, %v286
    %vm288 = vcmp.eq.f32.partialorder %v262, inf
    %v289 = vsel %vm288, %v262, %v287
    %vm290 = vcmp.eq.f32.partialorder %v262, 0.0
    %v291 = vand.u32 %v262, 2147483648
    %v292 = vsel %vm290, %v291, %v289
    %v293 = vrsqrt.pop %v263
    %v294 = vmul.f32 %v263, %v293
    %vm295 = vcmp.eq.f32.partialorder %v263, inf
    %v296 = vsel %vm295, %v263, %v294
    %vm297 = vcmp.eq.f32.partialorder %v263, 0.0
    %v298 = vand.u32 %v263, 2147483648
    %v299 = vsel %vm297, %v298, %v296
    %v300 = vrsqrt.pop %v264
    %v301 = vmul.f32 %v264, %v300
    %vm302 = vcmp.eq.f32.partialorder %v264, inf
    %v303 = vsel %vm302, %v264, %v301
    %vm304 = vcmp.eq.f32.partialorder %v264, 0.0
    %v305 = vand.u32 %v264, 2147483648
    %v306 = vsel %vm304, %v305, %v303
    %v307 = vrsqrt.pop %v265
    %v308 = vmul.f32 %v265, %v307
    %vm309 = vcmp.eq.f32.partialorder %v265, inf
    %v310 = vsel %vm309, %v265, %v308
    %vm311 = vcmp.eq.f32.partialorder %v265, 0.0
    %v312 = vand.u32 %v265, 2147483648
    %v313 = vsel %vm311, %v312, %v310
    %v314 = vrsqrt.pop %v266
    %v315 = vmul.f32 %v266, %v314
    %vm316 = vcmp.eq.f32.partialorder %v266, inf
    %v317 = vsel %vm316, %v266, %v315
    %vm318 = vcmp.eq.f32.partialorder %v266, 0.0
    %v319 = vand.u32 %v266, 2147483648
    %v320 = vsel %vm318, %v319, %v317
    %v321 = vrsqrt.pop %v267
    %v322 = vmul.f32 %v267, %v321
    %vm323 = vcmp.eq.f32.partialorder %v267, inf
    %v324 = vsel %vm323, %v267, %v322
    %vm325 = vcmp.eq.f32.partialorder %v267, 0.0
    %v326 = vand.u32 %v267, 2147483648
    %v327 = vsel %vm325, %v326, %v324
    %v328 = vrsqrt.pop %v268
    %v329 = vmul.f32 %v268, %v328
    %vm330 = vcmp.eq.f32.partialorder %v268, inf
    %v331 = vsel %vm330, %v268, %v329
    %vm332 = vcmp.eq.f32.partialorder %v268, 0.0
    %v333 = vand.u32 %v268, 2147483648
    %v334 = vsel %vm332, %v333, %v331
    %v335 = vrsqrt.pop %v269
    %v336 = vmul.f32 %v269, %v335
    %vm337 = vcmp.eq.f32.partialorder %v269, inf
    %v338 = vsel %vm337, %v269, %v336
    %vm339 = vcmp.eq.f32.partialorder %v269, 0.0
    %v340 = vand.u32 %v269, 2147483648
    %v341 = vsel %vm339, %v340, %v338
    %v342 = vrsqrt.pop %v270
    %v343 = vmul.f32 %v270, %v342
    %vm344 = vcmp.eq.f32.partialorder %v270, inf
    %v345 = vsel %vm344, %v270, %v343
    %vm346 = vcmp.eq.f32.partialorder %v270, 0.0
    %v347 = vand.u32 %v270, 2147483648
    %v348 = vsel %vm346, %v347, %v345
    %v349 = vrsqrt.pop %v271
    %v350 = vmul.f32 %v271, %v349
    %vm351 = vcmp.eq.f32.partialorder %v271, inf
    %v352 = vsel %vm351, %v271, %v350
    %vm353 = vcmp.eq.f32.partialorder %v271, 0.0
    %v354 = vand.u32 %v271, 2147483648
    %v355 = vsel %vm353, %v354, %v352
    %v356 = vld [vmem:[#allocation6] sm:$0xff]
    %v357 = vld [vmem:[#allocation6 + $0x8] sm:$0xff]
    %v358 = vld [vmem:[#allocation6 + $0x10] sm:$0xff]
    %v359 = vld [vmem:[#allocation6 + $0x18] sm:$0xff]
    %v360 = vld [vmem:[#allocation6 + $0x20] sm:$0xff]
    %v361 = vld [vmem:[#allocation6 + $0x28] sm:$0xff]
    %v362 = vld [vmem:[#allocation6 + $0x30] sm:$0xff]
    %v363 = vld [vmem:[#allocation6 + $0x38] sm:$0xff]
    %v364 = vld [vmem:[#allocation6 + $0x40] sm:$0xff]
    %v365 = vld [vmem:[#allocation6 + $0x48] sm:$0xff]
    %v366 = vld [vmem:[#allocation6 + $0x50] sm:$0xff]
    %v367 = vld [vmem:[#allocation6 + $0x58] sm:$0xff]
    %v368 = vld [vmem:[#allocation6 + $0x60] sm:$0xff]
    %v369 = vld [vmem:[#allocation6 + $0x68] sm:$0xff]
    %v370 = vld [vmem:[#allocation6 + $0x70] sm:$0xff]
    %v371 = vld [vmem:[#allocation6 + $0x78] sm:$0xff]
    %372 = vmatprep.subr.mxu0 0.0
    %373 = vmatpush1.msra.mxu0 %v371
    %374 = vmatprep.subr.mxu0 0.0
    %375 = vmatpush1.msra.mxu0 %v370
    %376 = vmatprep.subr.mxu0 0.0
    %377 = vmatpush1.msra.mxu0 %v369
    %378 = vmatprep.subr.mxu0 0.0
    %379 = vmatpush1.msra.mxu0 %v368
    %380 = vmatprep.subr.mxu0 0.0
    %381 = vmatpush1.msra.mxu0 %v367
    %382 = vmatprep.subr.mxu0 0.0
    %383 = vmatpush1.msra.mxu0 %v366
    %384 = vmatprep.subr.mxu0 0.0
    %385 = vmatpush1.msra.mxu0 %v365
    %386 = vmatprep.subr.mxu0 0.0
    %387 = vmatpush1.msra.mxu0 %v364
    %388 = vmatprep.subr.mxu0 0.0
    %389 = vmatpush1.msra.mxu0 %v363
    %390 = vmatprep.subr.mxu0 0.0
    %391 = vmatpush1.msra.mxu0 %v362
    %392 = vmatprep.subr.mxu0 0.0
    %393 = vmatpush1.msra.mxu0 %v361
    %394 = vmatprep.subr.mxu0 0.0
    %395 = vmatpush1.msra.mxu0 %v360
    %396 = vmatprep.subr.mxu0 0.0
    %397 = vmatpush1.msra.mxu0 %v359
    %398 = vmatprep.subr.mxu0 0.0
    %399 = vmatpush1.msra.mxu0 %v358
    %400 = vmatprep.subr.mxu0 0.0
    %401 = vmatpush1.msra.mxu0 %v357
    %402 = vmatprep.subr.mxu0 0.0
    %403 = vmatpush1.msra.mxu0 %v356
    %404 = vmatprep.subr.mxu0 0.0
    %405 = vmatpush2.msra.mxu0 0.0
    %406 = vmatprep.subr.mxu0 0.0
    %407 = vmatpush2.msra.mxu0 0.0
    %408 = vmatprep.subr.mxu0 0.0
    %409 = vmatpush2.msra.mxu0 0.0
    %410 = vmatprep.subr.mxu0 0.0
    %411 = vmatpush2.msra.mxu0 0.0
    %412 = vmatprep.subr.mxu0 0.0
    %413 = vmatpush2.msra.mxu0 0.0
    %414 = vmatprep.subr.mxu0 0.0
    %415 = vmatpush2.msra.mxu0 0.0
    %416 = vmatprep.subr.mxu0 0.0
    %417 = vmatpush2.msra.mxu0 0.0
    %418 = vmatprep.subr.mxu0 0.0
    %419 = vmatpush2.msra.mxu0 0.0
    %420 = vmatprep.subr.mxu0 0.0
    %421 = vmatpush2.msra.mxu0 0.0
    %422 = vmatprep.subr.mxu0 0.0
    %423 = vmatpush2.msra.mxu0 0.0
    %424 = vmatprep.subr.mxu0 0.0
    %425 = vmatpush2.msra.mxu0 0.0
    %426 = vmatprep.subr.mxu0 0.0
    %427 = vmatpush2.msra.mxu0 0.0
    %428 = vmatprep.subr.mxu0 0.0
    %429 = vmatpush2.msra.mxu0 0.0
    %430 = vmatprep.subr.mxu0 0.0
    %431 = vmatpush2.msra.mxu0 0.0
    %432 = vmatprep.subr.mxu0 0.0
    %433 = vmatpush2.msra.mxu0 0.0
    %434 = vmatprep.subr.mxu0 0.0
    %435 = vmatpush2.msra.mxu0 0.0
    %436 = vmatprep.mubr.f32.mxu0 0.0
    %437 = vmatmul.mubr.f32.gmra.mxu0 %v278
    %v438 = vpop.f32.mrf.mxu0
    %v439 = vadd.f32 0.0, %v438
    %v440 = vpop.f32.mrf.mxu0
    %441 = vmatprep.mubr.f32.mxu0 0.0
    %442 = vmatmul.mubr.f32.gmra.mxu0 %v285
    %v443 = vpop.f32.mrf.mxu0
    %v444 = vadd.f32 0.0, %v443
    %v445 = vpop.f32.mrf.mxu0
    %446 = vmatprep.mubr.f32.mxu0 0.0
    %447 = vmatmul.mubr.f32.gmra.mxu0 %v292
    %v448 = vpop.f32.mrf.mxu0
    %v449 = vadd.f32 0.0, %v448
    %v450 = vpop.f32.mrf.mxu0
    %451 = vmatprep.mubr.f32.mxu0 0.0
    %452 = vmatmul.mubr.f32.gmra.mxu0 %v299
    %v453 = vpop.f32.mrf.mxu0
    %v454 = vadd.f32 0.0, %v453
    %v455 = vpop.f32.mrf.mxu0
    %456 = vmatprep.mubr.f32.mxu0 0.0
    %457 = vmatmul.mubr.f32.gmra.mxu0 %v306
    %v458 = vpop.f32.mrf.mxu0
    %v459 = vadd.f32 0.0, %v458
    %v460 = vpop.f32.mrf.mxu0
    %461 = vmatprep.mubr.f32.mxu0 0.0
    %462 = vmatmul.mubr.f32.gmra.mxu0 %v313
    %v463 = vpop.f32.mrf.mxu0
    %v464 = vadd.f32 0.0, %v463
    %v465 = vpop.f32.mrf.mxu0
    %466 = vmatprep.mubr.f32.mxu0 0.0
    %467 = vmatmul.mubr.f32.gmra.mxu0 %v320
    %v468 = vpop.f32.mrf.mxu0
    %v469 = vadd.f32 0.0, %v468
    %v470 = vpop.f32.mrf.mxu0
    %471 = vmatprep.mubr.f32.mxu0 0.0
    %472 = vmatmul.mubr.f32.gmra.mxu0 %v327
    %v473 = vpop.f32.mrf.mxu0
    %v474 = vadd.f32 0.0, %v473
    %v475 = vpop.f32.mrf.mxu0
    %476 = vmatprep.mubr.f32.mxu0 0.0
    %477 = vmatmul.mubr.f32.gmra.mxu0 %v334
    %v478 = vpop.f32.mrf.mxu0
    %v479 = vadd.f32 0.0, %v478
    %v480 = vpop.f32.mrf.mxu0
    %481 = vmatprep.mubr.f32.mxu0 0.0
    %482 = vmatmul.mubr.f32.gmra.mxu0 %v341
    %v483 = vpop.f32.mrf.mxu0
    %v484 = vadd.f32 0.0, %v483
    %v485 = vpop.f32.mrf.mxu0
    %486 = vmatprep.mubr.f32.mxu0 0.0
    %487 = vmatmul.mubr.f32.gmra.mxu0 %v348
    %v488 = vpop.f32.mrf.mxu0
    %v489 = vadd.f32 0.0, %v488
    %v490 = vpop.f32.mrf.mxu0
    %491 = vmatprep.mubr.f32.mxu0 0.0
    %492 = vmatmul.mubr.f32.gmra.mxu0 %v355
    %v493 = vpop.f32.mrf.mxu0
    %v494 = vadd.f32 0.0, %v493
    %v495 = vpop.f32.mrf.mxu0
    %496 = vdwg.mxu0
    %v497 = vmul.f32 %v439, %v439
    %v498 = vmul.f32 %v444, %v444
    %v499 = vmul.f32 %v449, %v449
    %v500 = vmul.f32 %v454, %v454
    %v501 = vmul.f32 %v459, %v459
    %v502 = vmul.f32 %v464, %v464
    %v503 = vmul.f32 %v469, %v469
    %v504 = vmul.f32 %v474, %v474
    %v505 = vmul.f32 %v479, %v479
    %v506 = vmul.f32 %v484, %v484
    %v507 = vmul.f32 %v489, %v489
    %v508 = vmul.f32 %v494, %v494
    %509 = vadd.xlane.f32.xlu0 %v497
    %v510 = vpop.xlane.xlu0 %509
    %511 = vadd.xlane.f32.xlu0 %v498
    %v512 = vpop.xlane.xlu0 %511
    %513 = vadd.xlane.f32.xlu0 %v499
    %v514 = vpop.xlane.xlu0 %513
    %515 = vadd.xlane.f32.xlu0 %v500
    %v516 = vpop.xlane.xlu0 %515
    %517 = vadd.xlane.f32.xlu0 %v501
    %v518 = vpop.xlane.xlu0 %517
    %519 = vadd.xlane.f32.xlu0 %v502
    %v520 = vpop.xlane.xlu0 %519
    %521 = vadd.xlane.f32.xlu0 %v503
    %v522 = vpop.xlane.xlu0 %521
    %523 = vadd.xlane.f32.xlu0 %v504
    %v524 = vpop.xlane.xlu0 %523
    %525 = vadd.xlane.f32.xlu0 %v505
    %v526 = vpop.xlane.xlu0 %525
    %527 = vadd.xlane.f32.xlu0 %v506
    %v528 = vpop.xlane.xlu0 %527
    %529 = vadd.xlane.f32.xlu0 %v507
    %v530 = vpop.xlane.xlu0 %529
    %531 = vadd.xlane.f32.xlu0 %v508
    %v532 = vpop.xlane.xlu0 %531
    %533 = vst [vmem:[#allocation2] sm:$0xff] 0.0
    %534 = vst [vmem:[#allocation2 + $0x8] sm:$0xff] 0.0
    %535 = vst [vmem:[#allocation2 + $0x10] sm:$0xff] 0.0
    %536 = vst [vmem:[#allocation2 + $0x18] sm:$0xff] 0.0
    %537 = vst [vmem:[#allocation2 + $0x20] sm:$0xff] 0.0
    %538 = vst [vmem:[#allocation2 + $0x28] sm:$0xff] 0.0
    %539 = vst [vmem:[#allocation2 + $0x30] sm:$0xff] 0.0
    %540 = vst [vmem:[#allocation2 + $0x38] sm:$0xff] 0.0
    %541 = vst [vmem:[#allocation2 + $0x40] sm:$0xff] 0.0
    %542 = vst [vmem:[#allocation2 + $0x48] sm:$0xff] 0.0
    %543 = vst [vmem:[#allocation2 + $0x50] sm:$0xff] 0.0
    %544 = vst [vmem:[#allocation2 + $0x58] sm:$0xff] 0.0
    %545 = vst [vmem:[#allocation2 + $0x60] sm:$0xff] 0.0
    %546 = vst [vmem:[#allocation2 + $0x68] sm:$0xff] 0.0
    %547 = vst [vmem:[#allocation2 + $0x70] sm:$0xff] 0.0
    %548 = vst [vmem:[#allocation2 + $0x78] sm:$0xff] 0.0
    %v549 = vlaneseq
    %v550 = vshrl.u32 %v549, 7
    %v551 = vadd.s32 %v550, 8
    %v552 = vadd.s32 %v550, 16
    %v553 = vlaneseq
    %v554 = vand.u32 %v553, 127
    %vm555 = vcmp.eq.s32.totalorder %v550, %v554
    %vm556 = vcmp.eq.s32.totalorder %v551, %v554
    %vm557 = vcmp.eq.s32.totalorder %v552, %v554
    %v558 = vsel %vm555, 1, 0
    %v559 = vsel %vm556, 1, 0
    %v560 = vsel %vm557, 1, 0
    %v561 = vcvt.s32.f32 %v558
    %v562 = vcvt.s32.f32 %v559
    %v563 = vcvt.s32.f32 %v560
    %vm564 = vcmp.lt.s32.totalorder %v554, 22
    %vm565 = vmxor %vm555, 1
    %vm566 = vmxor %vm556, 1
    %vm567 = vmxor %vm557, 1
    %vm568 = vmand %vm564, %vm565
    %vm569 = vmand %vm564, %vm566
    %vm570 = vmand %vm564, %vm567
    %v571 = vsel %vm568, 1, 0
    %v572 = vsel %vm569, 1, 0
    %v573 = vsel %vm570, 1, 0
    %v574 = vcvt.s32.f32 %v571
    %v575 = vcvt.s32.f32 %v572
    %v576 = vcvt.s32.f32 %v573
    %577 = vst [vmem:[#allocation2] sm:$0xff] %v439
    %578 = vst [vmem:[#allocation2 + $0x8] sm:$0xff] %v444
    %579 = vst [vmem:[#allocation2 + $0x10] sm:$0xff] %v449
    %v580 = vld [vmem:[#allocation2] sm:$0xff]
    %v581 = vld [vmem:[#allocation2 + $0x8] sm:$0xff]
    %v582 = vld [vmem:[#allocation2 + $0x10] sm:$0xff]
    %v583 = vld [vmem:[#allocation2 + $0x18] sm:$0xff]
    %v584 = vld [vmem:[#allocation2 + $0x20] sm:$0xff]
    %v585 = vld [vmem:[#allocation2 + $0x28] sm:$0xff]
    %v586 = vld [vmem:[#allocation2 + $0x30] sm:$0xff]
    %v587 = vld [vmem:[#allocation2 + $0x38] sm:$0xff]
    %v588 = vld [vmem:[#allocation2 + $0x40] sm:$0xff]
    %v589 = vld [vmem:[#allocation2 + $0x48] sm:$0xff]
    %v590 = vld [vmem:[#allocation2 + $0x50] sm:$0xff]
    %v591 = vld [vmem:[#allocation2 + $0x58] sm:$0xff]
    %v592 = vld [vmem:[#allocation2 + $0x60] sm:$0xff]
    %v593 = vld [vmem:[#allocation2 + $0x68] sm:$0xff]
    %v594 = vld [vmem:[#allocation2 + $0x70] sm:$0xff]
    %v595 = vld [vmem:[#allocation2 + $0x78] sm:$0xff]
    %596 = vmatprep.subr.mxu0 0.0
    %597 = vmatpush1.xpose.msra.mxu0 %v595
    %598 = vmatprep.subr.mxu0 0.0
    %599 = vmatpush1.xpose.msra.mxu0 %v594
    %600 = vmatprep.subr.mxu0 0.0
    %601 = vmatpush1.xpose.msra.mxu0 %v593
    %602 = vmatprep.subr.mxu0 0.0
    %603 = vmatpush1.xpose.msra.mxu0 %v592
    %604 = vmatprep.subr.mxu0 0.0
    %605 = vmatpush1.xpose.msra.mxu0 %v591
    %606 = vmatprep.subr.mxu0 0.0
    %607 = vmatpush1.xpose.msra.mxu0 %v590
    %608 = vmatprep.subr.mxu0 0.0
    %609 = vmatpush1.xpose.msra.mxu0 %v589
    %610 = vmatprep.subr.mxu0 0.0
    %611 = vmatpush1.xpose.msra.mxu0 %v588
    %612 = vmatprep.subr.mxu0 0.0
    %613 = vmatpush1.xpose.msra.mxu0 %v587
    %614 = vmatprep.subr.mxu0 0.0
    %615 = vmatpush1.xpose.msra.mxu0 %v586
    %616 = vmatprep.subr.mxu0 0.0
    %617 = vmatpush1.xpose.msra.mxu0 %v585
    %618 = vmatprep.subr.mxu0 0.0
    %619 = vmatpush1.xpose.msra.mxu0 %v584
    %620 = vmatprep.subr.mxu0 0.0
    %621 = vmatpush1.xpose.msra.mxu0 %v583
    %622 = vmatprep.subr.mxu0 0.0
    %623 = vmatpush1.xpose.msra.mxu0 %v582
    %624 = vmatprep.subr.mxu0 0.0
    %625 = vmatpush1.xpose.msra.mxu0 %v581
    %626 = vmatprep.subr.mxu0 0.0
    %627 = vmatpush1.xpose.msra.mxu0 %v580
    %628 = vmatprep.subr.mxu0 0.0
    %629 = vmatpush2.xpose.msra.mxu0 0.0
    %630 = vmatprep.subr.mxu0 0.0
    %631 = vmatpush2.xpose.msra.mxu0 0.0
    %632 = vmatprep.subr.mxu0 0.0
    %633 = vmatpush2.xpose.msra.mxu0 0.0
    %634 = vmatprep.subr.mxu0 0.0
    %635 = vmatpush2.xpose.msra.mxu0 0.0
    %636 = vmatprep.subr.mxu0 0.0
    %637 = vmatpush2.xpose.msra.mxu0 0.0
    %638 = vmatprep.subr.mxu0 0.0
    %639 = vmatpush2.xpose.msra.mxu0 0.0
    %640 = vmatprep.subr.mxu0 0.0
    %641 = vmatpush2.xpose.msra.mxu0 0.0
    %642 = vmatprep.subr.mxu0 0.0
    %643 = vmatpush2.xpose.msra.mxu0 0.0
    %644 = vmatprep.subr.mxu0 0.0
    %645 = vmatpush2.xpose.msra.mxu0 0.0
    %646 = vmatprep.subr.mxu0 0.0
    %647 = vmatpush2.xpose.msra.mxu0 0.0
    %648 = vmatprep.subr.mxu0 0.0
    %649 = vmatpush2.xpose.msra.mxu0 0.0
    %650 = vmatprep.subr.mxu0 0.0
    %651 = vmatpush2.xpose.msra.mxu0 0.0
    %652 = vmatprep.subr.mxu0 0.0
    %653 = vmatpush2.xpose.msra.mxu0 0.0
    %654 = vmatprep.subr.mxu0 0.0
    %655 = vmatpush2.xpose.msra.mxu0 0.0
    %656 = vmatprep.subr.mxu0 0.0
    %657 = vmatpush2.xpose.msra.mxu0 0.0
    %658 = vmatprep.subr.mxu0 0.0
    %659 = vmatpush2.xpose.msra.mxu0 0.0
    %660 = vmatprep.mubr.f32.mxu0 0.0
    %661 = vmatmul.mubr.f32.gmra.mxu0 %v439
    %v662 = vpop.f32.mrf.mxu0
    %v663 = vadd.f32 0.0, %v662
    %v664 = vpop.f32.mrf.mxu0
    %665 = vmatprep.mubr.f32.mxu0 0.0
    %666 = vmatmul.mubr.f32.gmra.mxu0 %v444
    %v667 = vpop.f32.mrf.mxu0
    %v668 = vadd.f32 0.0, %v667
    %v669 = vpop.f32.mrf.mxu0
    %670 = vmatprep.mubr.f32.mxu0 0.0
    %671 = vmatmul.mubr.f32.gmra.mxu0 %v449
    %v672 = vpop.f32.mrf.mxu0
    %v673 = vadd.f32 0.0, %v672
    %v674 = vpop.f32.mrf.mxu0
    %675 = vdwg.mxu0
    %v676 = vsel %vm555, %v663, 0.0
    %v677 = vsel %vm556, %v668, 0.0
    %v678 = vsel %vm557, %v673, 0.0
    %v679 = vadd.f32 %v676, %v677
    %v680 = vadd.f32 %v679, %v678
    %v681 = vrot.slane %v680, 4
    %v682 = vadd.f32 %v680, %v681
    %v683 = vrot.slane %v682, 2
    %v684 = vadd.f32 %v682, %v683
    %v685 = vrot.slane %v684, 1
    %v686 = vadd.f32 %v684, %v685
    %v687 = vadd.f32 %v510, %v686
    %v688 = vadd.f32 %v512, %v686
    %v689 = vadd.f32 %v514, %v686
    %v690 = vmul.f32 %v663, 2.0
    %v691 = vmul.f32 %v668, 2.0
    %v692 = vmul.f32 %v673, 2.0
    %v693 = vsub.f32 %v687, %v690
    %v694 = vsub.f32 %v688, %v691
    %v695 = vsub.f32 %v689, %v692
    %v696 = vmax.f32 %v693, 0.0
    %v697 = vmax.f32 %v694, 0.0
    %v698 = vmax.f32 %v695, 0.0
    %v699 = vadd.f32 %v696, 1e-10
    %v700 = vadd.f32 %v697, 1e-10
    %v701 = vadd.f32 %v698, 1e-10
    %v702 = vrcp.pop %v699
    %v703 = vrcp.pop %v700
    %v704 = vrcp.pop %v701
    %v705 = vmul.f32 %v702, %v574
    %v706 = vmul.f32 %v703, %v575
    %v707 = vmul.f32 %v704, %v576
    %708 = vmax.xlane.f32.xlu0 %v705
    %v709 = vpop.xlane.xlu0 %708
    %710 = vmax.xlane.f32.xlu0 %v706
    %v711 = vpop.xlane.xlu0 %710
    %712 = vmax.xlane.f32.xlu0 %v707
    %v713 = vpop.xlane.xlu0 %712
    %v714 = vrcp.pop %v709
    %v715 = vrcp.pop %v711
    %v716 = vrcp.pop %v713
    %v717 = vmul.f32 %v705, %v714
    %v718 = vmul.f32 %v706, %v715
    %v719 = vmul.f32 %v707, %v716
    %v720 = vadd.f32 %v717, %v561
    %v721 = vadd.f32 %v718, %v562
    %v722 = vadd.f32 %v719, %v563
    %v723 = vmul.f32 %v720, 0.99
    %v724 = vmul.f32 %v721, 0.99
    %v725 = vmul.f32 %v722, 0.99
    %v726 = vld [vmem:[%s3] sm:$0xff]
    %v727 = vld [vmem:[%s3 + $0x8] sm:$0xff]
    %v728 = vld [vmem:[%s3 + $0x10] sm:$0xff]
    %vm729 = vcmp.ge.f32.partialorder %v723, %v726
    %vm730 = vcmp.ge.f32.partialorder %v724, %v727
    %vm731 = vcmp.ge.f32.partialorder %v725, %v728
    %v732 = vsel %vm729, 1, 0
    %v733 = vsel %vm730, 1, 0
    %v734 = vsel %vm731, 1, 0
    %v735 = vcvt.s32.f32 %v732
    %v736 = vcvt.s32.f32 %v733
    %v737 = vcvt.s32.f32 %v734
    %738 = vst [vmem:[#allocation8] sm:$0xff] %v735
    %739 = vst [vmem:[#allocation8 + $0x8] sm:$0xff] %v736
    %740 = vst [vmem:[#allocation8 + $0x10] sm:$0xff] %v737
    %741 = vst [vmem:[#allocation2] sm:$0xff] %v454
    %742 = vst [vmem:[#allocation2 + $0x8] sm:$0xff] %v459
    %743 = vst [vmem:[#allocation2 + $0x10] sm:$0xff] %v464
    %v744 = vld [vmem:[#allocation2] sm:$0xff]
    %v745 = vld [vmem:[#allocation2 + $0x8] sm:$0xff]
    %v746 = vld [vmem:[#allocation2 + $0x10] sm:$0xff]
    %v747 = vld [vmem:[#allocation2 + $0x18] sm:$0xff]
    %v748 = vld [vmem:[#allocation2 + $0x20] sm:$0xff]
    %v749 = vld [vmem:[#allocation2 + $0x28] sm:$0xff]
    %v750 = vld [vmem:[#allocation2 + $0x30] sm:$0xff]
    %v751 = vld [vmem:[#allocation2 + $0x38] sm:$0xff]
    %v752 = vld [vmem:[#allocation2 + $0x40] sm:$0xff]
    %v753 = vld [vmem:[#allocation2 + $0x48] sm:$0xff]
    %v754 = vld [vmem:[#allocation2 + $0x50] sm:$0xff]
    %v755 = vld [vmem:[#allocation2 + $0x58] sm:$0xff]
    %v756 = vld [vmem:[#allocation2 + $0x60] sm:$0xff]
    %v757 = vld [vmem:[#allocation2 + $0x68] sm:$0xff]
    %v758 = vld [vmem:[#allocation2 + $0x70] sm:$0xff]
    %v759 = vld [vmem:[#allocation2 + $0x78] sm:$0xff]
    %760 = vmatprep.subr.mxu0 0.0
    %761 = vmatpush1.xpose.msra.mxu0 %v759
    %762 = vmatprep.subr.mxu0 0.0
    %763 = vmatpush1.xpose.msra.mxu0 %v758
    %764 = vmatprep.subr.mxu0 0.0
    %765 = vmatpush1.xpose.msra.mxu0 %v757
    %766 = vmatprep.subr.mxu0 0.0
    %767 = vmatpush1.xpose.msra.mxu0 %v756
    %768 = vmatprep.subr.mxu0 0.0
    %769 = vmatpush1.xpose.msra.mxu0 %v755
    %770 = vmatprep.subr.mxu0 0.0
    %771 = vmatpush1.xpose.msra.mxu0 %v754
    %772 = vmatprep.subr.mxu0 0.0
    %773 = vmatpush1.xpose.msra.mxu0 %v753
    %774 = vmatprep.subr.mxu0 0.0
    %775 = vmatpush1.xpose.msra.mxu0 %v752
    %776 = vmatprep.subr.mxu0 0.0
    %777 = vmatpush1.xpose.msra.mxu0 %v751
    %778 = vmatprep.subr.mxu0 0.0
    %779 = vmatpush1.xpose.msra.mxu0 %v750
    %780 = vmatprep.subr.mxu0 0.0
    %781 = vmatpush1.xpose.msra.mxu0 %v749
    %782 = vmatprep.subr.mxu0 0.0
    %783 = vmatpush1.xpose.msra.mxu0 %v748
    %784 = vmatprep.subr.mxu0 0.0
    %785 = vmatpush1.xpose.msra.mxu0 %v747
    %786 = vmatprep.subr.mxu0 0.0
    %787 = vmatpush1.xpose.msra.mxu0 %v746
    %788 = vmatprep.subr.mxu0 0.0
    %789 = vmatpush1.xpose.msra.mxu0 %v745
    %790 = vmatprep.subr.mxu0 0.0
    %791 = vmatpush1.xpose.msra.mxu0 %v744
    %792 = vmatprep.subr.mxu0 0.0
    %793 = vmatpush2.xpose.msra.mxu0 0.0
    %794 = vmatprep.subr.mxu0 0.0
    %795 = vmatpush2.xpose.msra.mxu0 0.0
    %796 = vmatprep.subr.mxu0 0.0
    %797 = vmatpush2.xpose.msra.mxu0 0.0
    %798 = vmatprep.subr.mxu0 0.0
    %799 = vmatpush2.xpose.msra.mxu0 0.0
    %800 = vmatprep.subr.mxu0 0.0
    %801 = vmatpush2.xpose.msra.mxu0 0.0
    %802 = vmatprep.subr.mxu0 0.0
    %803 = vmatpush2.xpose.msra.mxu0 0.0
    %804 = vmatprep.subr.mxu0 0.0
    %805 = vmatpush2.xpose.msra.mxu0 0.0
    %806 = vmatprep.subr.mxu0 0.0
    %807 = vmatpush2.xpose.msra.mxu0 0.0
    %808 = vmatprep.subr.mxu0 0.0
    %809 = vmatpush2.xpose.msra.mxu0 0.0
    %810 = vmatprep.subr.mxu0 0.0
    %811 = vmatpush2.xpose.msra.mxu0 0.0
    %812 = vmatprep.subr.mxu0 0.0
    %813 = vmatpush2.xpose.msra.mxu0 0.0
    %814 = vmatprep.subr.mxu0 0.0
    %815 = vmatpush2.xpose.msra.mxu0 0.0
    %816 = vmatprep.subr.mxu0 0.0
    %817 = vmatpush2.xpose.msra.mxu0 0.0
    %818 = vmatprep.subr.mxu0 0.0
    %819 = vmatpush2.xpose.msra.mxu0 0.0
    %820 = vmatprep.subr.mxu0 0.0
    %821 = vmatpush2.xpose.msra.mxu0 0.0
    %822 = vmatprep.subr.mxu0 0.0
    %823 = vmatpush2.xpose.msra.mxu0 0.0
    %824 = vmatprep.mubr.f32.mxu0 0.0
    %825 = vmatmul.mubr.f32.gmra.mxu0 %v454
    %v826 = vpop.f32.mrf.mxu0
    %v827 = vadd.f32 0.0, %v826
    %v828 = vpop.f32.mrf.mxu0
    %829 = vmatprep.mubr.f32.mxu0 0.0
    %830 = vmatmul.mubr.f32.gmra.mxu0 %v459
    %v831 = vpop.f32.mrf.mxu0
    %v832 = vadd.f32 0.0, %v831
    %v833 = vpop.f32.mrf.mxu0
    %834 = vmatprep.mubr.f32.mxu0 0.0
    %835 = vmatmul.mubr.f32.gmra.mxu0 %v464
    %v836 = vpop.f32.mrf.mxu0
    %v837 = vadd.f32 0.0, %v836
    %v838 = vpop.f32.mrf.mxu0
    %839 = vdwg.mxu0
    %v840 = vsel %vm555, %v827, 0.0
    %v841 = vsel %vm556, %v832, 0.0
    %v842 = vsel %vm557, %v837, 0.0
    %v843 = vadd.f32 %v840, %v841
    %v844 = vadd.f32 %v843, %v842
    %v845 = vrot.slane %v844, 4
    %v846 = vadd.f32 %v844, %v845
    %v847 = vrot.slane %v846, 2
    %v848 = vadd.f32 %v846, %v847
    %v849 = vrot.slane %v848, 1
    %v850 = vadd.f32 %v848, %v849
    %v851 = vadd.f32 %v516, %v850
    %v852 = vadd.f32 %v518, %v850
    %v853 = vadd.f32 %v520, %v850
    %v854 = vmul.f32 %v827, 2.0
    %v855 = vmul.f32 %v832, 2.0
    %v856 = vmul.f32 %v837, 2.0
    %v857 = vsub.f32 %v851, %v854
    %v858 = vsub.f32 %v852, %v855
    %v859 = vsub.f32 %v853, %v856
    %v860 = vmax.f32 %v857, 0.0
    %v861 = vmax.f32 %v858, 0.0
    %v862 = vmax.f32 %v859, 0.0
    %v863 = vadd.f32 %v860, 1e-10
    %v864 = vadd.f32 %v861, 1e-10
    %v865 = vadd.f32 %v862, 1e-10
    %v866 = vrcp.pop %v863
    %v867 = vrcp.pop %v864
    %v868 = vrcp.pop %v865
    %v869 = vmul.f32 %v866, %v574
    %v870 = vmul.f32 %v867, %v575
    %v871 = vmul.f32 %v868, %v576
    %872 = vmax.xlane.f32.xlu0 %v869
    %v873 = vpop.xlane.xlu0 %872
    %874 = vmax.xlane.f32.xlu0 %v870
    %v875 = vpop.xlane.xlu0 %874
    %876 = vmax.xlane.f32.xlu0 %v871
    %v877 = vpop.xlane.xlu0 %876
    %v878 = vrcp.pop %v873
    %v879 = vrcp.pop %v875
    %v880 = vrcp.pop %v877
    %v881 = vmul.f32 %v869, %v878
    %v882 = vmul.f32 %v870, %v879
    %v883 = vmul.f32 %v871, %v880
    %v884 = vadd.f32 %v881, %v561
    %v885 = vadd.f32 %v882, %v562
    %v886 = vadd.f32 %v883, %v563
    %v887 = vmul.f32 %v884, 0.99
    %v888 = vmul.f32 %v885, 0.99
    %v889 = vmul.f32 %v886, 0.99
    %s890 = scalar_lea.vmem %s3, 24
    %v891 = vld [vmem:[%s890] sm:$0xff]
    %v892 = vld [vmem:[%s890 + $0x8] sm:$0xff]
    %v893 = vld [vmem:[%s890 + $0x10] sm:$0xff]
    %vm894 = vcmp.ge.f32.partialorder %v887, %v891
    %vm895 = vcmp.ge.f32.partialorder %v888, %v892
    %vm896 = vcmp.ge.f32.partialorder %v889, %v893
    %v897 = vsel %vm894, 1, 0
    %v898 = vsel %vm895, 1, 0
    %v899 = vsel %vm896, 1, 0
    %v900 = vcvt.s32.f32 %v897
    %v901 = vcvt.s32.f32 %v898
    %v902 = vcvt.s32.f32 %v899
    %s903 = scalar_lea.vmem [#allocation8], 24
    %904 = vst [vmem:[%s903] sm:$0xff] %v900
    %905 = vst [vmem:[%s903 + $0x8] sm:$0xff] %v901
    %906 = vst [vmem:[%s903 + $0x10] sm:$0xff] %v902
    %907 = vst [vmem:[#allocation2] sm:$0xff] %v469
    %908 = vst [vmem:[#allocation2 + $0x8] sm:$0xff] %v474
    %909 = vst [vmem:[#allocation2 + $0x10] sm:$0xff] %v479
    %v910 = vld [vmem:[#allocation2] sm:$0xff]
    %v911 = vld [vmem:[#allocation2 + $0x8] sm:$0xff]
    %v912 = vld [vmem:[#allocation2 + $0x10] sm:$0xff]
    %v913 = vld [vmem:[#allocation2 + $0x18] sm:$0xff]
    %v914 = vld [vmem:[#allocation2 + $0x20] sm:$0xff]
    %v915 = vld [vmem:[#allocation2 + $0x28] sm:$0xff]
    %v916 = vld [vmem:[#allocation2 + $0x30] sm:$0xff]
    %v917 = vld [vmem:[#allocation2 + $0x38] sm:$0xff]
    %v918 = vld [vmem:[#allocation2 + $0x40] sm:$0xff]
    %v919 = vld [vmem:[#allocation2 + $0x48] sm:$0xff]
    %v920 = vld [vmem:[#allocation2 + $0x50] sm:$0xff]
    %v921 = vld [vmem:[#allocation2 + $0x58] sm:$0xff]
    %v922 = vld [vmem:[#allocation2 + $0x60] sm:$0xff]
    %v923 = vld [vmem:[#allocation2 + $0x68] sm:$0xff]
    %v924 = vld [vmem:[#allocation2 + $0x70] sm:$0xff]
    %v925 = vld [vmem:[#allocation2 + $0x78] sm:$0xff]
    %926 = vmatprep.subr.mxu0 0.0
    %927 = vmatpush1.xpose.msra.mxu0 %v925
    %928 = vmatprep.subr.mxu0 0.0
    %929 = vmatpush1.xpose.msra.mxu0 %v924
    %930 = vmatprep.subr.mxu0 0.0
    %931 = vmatpush1.xpose.msra.mxu0 %v923
    %932 = vmatprep.subr.mxu0 0.0
    %933 = vmatpush1.xpose.msra.mxu0 %v922
    %934 = vmatprep.subr.mxu0 0.0
    %935 = vmatpush1.xpose.msra.mxu0 %v921
    %936 = vmatprep.subr.mxu0 0.0
    %937 = vmatpush1.xpose.msra.mxu0 %v920
    %938 = vmatprep.subr.mxu0 0.0
    %939 = vmatpush1.xpose.msra.mxu0 %v919
    %940 = vmatprep.subr.mxu0 0.0
    %941 = vmatpush1.xpose.msra.mxu0 %v918
    %942 = vmatprep.subr.mxu0 0.0
    %943 = vmatpush1.xpose.msra.mxu0 %v917
    %944 = vmatprep.subr.mxu0 0.0
    %945 = vmatpush1.xpose.msra.mxu0 %v916
    %946 = vmatprep.subr.mxu0 0.0
    %947 = vmatpush1.xpose.msra.mxu0 %v915
    %948 = vmatprep.subr.mxu0 0.0
    %949 = vmatpush1.xpose.msra.mxu0 %v914
    %950 = vmatprep.subr.mxu0 0.0
    %951 = vmatpush1.xpose.msra.mxu0 %v913
    %952 = vmatprep.subr.mxu0 0.0
    %953 = vmatpush1.xpose.msra.mxu0 %v912
    %954 = vmatprep.subr.mxu0 0.0
    %955 = vmatpush1.xpose.msra.mxu0 %v911
    %956 = vmatprep.subr.mxu0 0.0
    %957 = vmatpush1.xpose.msra.mxu0 %v910
    %958 = vmatprep.subr.mxu0 0.0
    %959 = vmatpush2.xpose.msra.mxu0 0.0
    %960 = vmatprep.subr.mxu0 0.0
    %961 = vmatpush2.xpose.msra.mxu0 0.0
    %962 = vmatprep.subr.mxu0 0.0
    %963 = vmatpush2.xpose.msra.mxu0 0.0
    %964 = vmatprep.subr.mxu0 0.0
    %965 = vmatpush2.xpose.msra.mxu0 0.0
    %966 = vmatprep.subr.mxu0 0.0
    %967 = vmatpush2.xpose.msra.mxu0 0.0
    %968 = vmatprep.subr.mxu0 0.0
    %969 = vmatpush2.xpose.msra.mxu0 0.0
    %970 = vmatprep.subr.mxu0 0.0
    %971 = vmatpush2.xpose.msra.mxu0 0.0
    %972 = vmatprep.subr.mxu0 0.0
    %973 = vmatpush2.xpose.msra.mxu0 0.0
    %974 = vmatprep.subr.mxu0 0.0
    %975 = vmatpush2.xpose.msra.mxu0 0.0
    %976 = vmatprep.subr.mxu0 0.0
    %977 = vmatpush2.xpose.msra.mxu0 0.0
    %978 = vmatprep.subr.mxu0 0.0
    %979 = vmatpush2.xpose.msra.mxu0 0.0
    %980 = vmatprep.subr.mxu0 0.0
    %981 = vmatpush2.xpose.msra.mxu0 0.0
    %982 = vmatprep.subr.mxu0 0.0
    %983 = vmatpush2.xpose.msra.mxu0 0.0
    %984 = vmatprep.subr.mxu0 0.0
    %985 = vmatpush2.xpose.msra.mxu0 0.0
    %986 = vmatprep.subr.mxu0 0.0
    %987 = vmatpush2.xpose.msra.mxu0 0.0
    %988 = vmatprep.subr.mxu0 0.0
    %989 = vmatpush2.xpose.msra.mxu0 0.0
    %990 = vmatprep.mubr.f32.mxu0 0.0
    %991 = vmatmul.mubr.f32.gmra.mxu0 %v469
    %v992 = vpop.f32.mrf.mxu0
    %v993 = vadd.f32 0.0, %v992
    %v994 = vpop.f32.mrf.mxu0
    %995 = vmatprep.mubr.f32.mxu0 0.0
    %996 = vmatmul.mubr.f32.gmra.mxu0 %v474
    %v997 = vpop.f32.mrf.mxu0
    %v998 = vadd.f32 0.0, %v997
    %v999 = vpop.f32.mrf.mxu0
    %1000 = vmatprep.mubr.f32.mxu0 0.0
    %1001 = vmatmul.mubr.f32.gmra.mxu0 %v479
    %v1002 = vpop.f32.mrf.mxu0
    %v1003 = vadd.f32 0.0, %v1002
    %v1004 = vpop.f32.mrf.mxu0
    %1005 = vdwg.mxu0
    %v1006 = vsel %vm555, %v993, 0.0
    %v1007 = vsel %vm556, %v998, 0.0
    %v1008 = vsel %vm557, %v1003, 0.0
    %v1009 = vadd.f32 %v1006, %v1007
    %v1010 = vadd.f32 %v1009, %v1008
    %v1011 = vrot.slane %v1010, 4
    %v1012 = vadd.f32 %v1010, %v1011
    %v1013 = vrot.slane %v1012, 2
    %v1014 = vadd.f32 %v1012, %v1013
    %v1015 = vrot.slane %v1014, 1
    %v1016 = vadd.f32 %v1014, %v1015
    %v1017 = vadd.f32 %v522, %v1016
    %v1018 = vadd.f32 %v524, %v1016
    %v1019 = vadd.f32 %v526, %v1016
    %v1020 = vmul.f32 %v993, 2.0
    %v1021 = vmul.f32 %v998, 2.0
    %v1022 = vmul.f32 %v1003, 2.0
    %v1023 = vsub.f32 %v1017, %v1020
    %v1024 = vsub.f32 %v1018, %v1021
    %v1025 = vsub.f32 %v1019, %v1022
    %v1026 = vmax.f32 %v1023, 0.0
    %v1027 = vmax.f32 %v1024, 0.0
    %v1028 = vmax.f32 %v1025, 0.0
    %v1029 = vadd.f32 %v1026, 1e-10
    %v1030 = vadd.f32 %v1027, 1e-10
    %v1031 = vadd.f32 %v1028, 1e-10
    %v1032 = vrcp.pop %v1029
    %v1033 = vrcp.pop %v1030
    %v1034 = vrcp.pop %v1031
    %v1035 = vmul.f32 %v1032, %v574
    %v1036 = vmul.f32 %v1033, %v575
    %v1037 = vmul.f32 %v1034, %v576
    %1038 = vmax.xlane.f32.xlu0 %v1035
    %v1039 = vpop.xlane.xlu0 %1038
    %1040 = vmax.xlane.f32.xlu0 %v1036
    %v1041 = vpop.xlane.xlu0 %1040
    %1042 = vmax.xlane.f32.xlu0 %v1037
    %v1043 = vpop.xlane.xlu0 %1042
    %v1044 = vrcp.pop %v1039
    %v1045 = vrcp.pop %v1041
    %v1046 = vrcp.pop %v1043
    %v1047 = vmul.f32 %v1035, %v1044
    %v1048 = vmul.f32 %v1036, %v1045
    %v1049 = vmul.f32 %v1037, %v1046
    %v1050 = vadd.f32 %v1047, %v561
    %v1051 = vadd.f32 %v1048, %v562
    %v1052 = vadd.f32 %v1049, %v563
    %v1053 = vmul.f32 %v1050, 0.99
    %v1054 = vmul.f32 %v1051, 0.99
    %v1055 = vmul.f32 %v1052, 0.99
    %s1056 = scalar_lea.vmem %s3, 48
    %v1057 = vld [vmem:[%s1056] sm:$0xff]
    %v1058 = vld [vmem:[%s1056 + $0x8] sm:$0xff]
    %v1059 = vld [vmem:[%s1056 + $0x10] sm:$0xff]
    %vm1060 = vcmp.ge.f32.partialorder %v1053, %v1057
    %vm1061 = vcmp.ge.f32.partialorder %v1054, %v1058
    %vm1062 = vcmp.ge.f32.partialorder %v1055, %v1059
    %v1063 = vsel %vm1060, 1, 0
    %v1064 = vsel %vm1061, 1, 0
    %v1065 = vsel %vm1062, 1, 0
    %v1066 = vcvt.s32.f32 %v1063
    %v1067 = vcvt.s32.f32 %v1064
    %v1068 = vcvt.s32.f32 %v1065
    %s1069 = scalar_lea.vmem [#allocation8], 48
    %1070 = vst [vmem:[%s1069] sm:$0xff] %v1066
    %1071 = vst [vmem:[%s1069 + $0x8] sm:$0xff] %v1067
    %1072 = vst [vmem:[%s1069 + $0x10] sm:$0xff] %v1068
    %1073 = vst [vmem:[#allocation2] sm:$0xff] %v484
    %1074 = vst [vmem:[#allocation2 + $0x8] sm:$0xff] %v489
    %1075 = vst [vmem:[#allocation2 + $0x10] sm:$0xff] %v494
    %v1076 = vld [vmem:[#allocation2] sm:$0xff]
    %v1077 = vld [vmem:[#allocation2 + $0x8] sm:$0xff]
    %v1078 = vld [vmem:[#allocation2 + $0x10] sm:$0xff]
    %v1079 = vld [vmem:[#allocation2 + $0x18] sm:$0xff]
    %v1080 = vld [vmem:[#allocation2 + $0x20] sm:$0xff]
    %v1081 = vld [vmem:[#allocation2 + $0x28] sm:$0xff]
    %v1082 = vld [vmem:[#allocation2 + $0x30] sm:$0xff]
    %v1083 = vld [vmem:[#allocation2 + $0x38] sm:$0xff]
    %v1084 = vld [vmem:[#allocation2 + $0x40] sm:$0xff]
    %v1085 = vld [vmem:[#allocation2 + $0x48] sm:$0xff]
    %v1086 = vld [vmem:[#allocation2 + $0x50] sm:$0xff]
    %v1087 = vld [vmem:[#allocation2 + $0x58] sm:$0xff]
    %v1088 = vld [vmem:[#allocation2 + $0x60] sm:$0xff]
    %v1089 = vld [vmem:[#allocation2 + $0x68] sm:$0xff]
    %v1090 = vld [vmem:[#allocation2 + $0x70] sm:$0xff]
    %v1091 = vld [vmem:[#allocation2 + $0x78] sm:$0xff]
    %1092 = vmatprep.subr.mxu0 0.0
    %1093 = vmatpush1.xpose.msra.mxu0 %v1091
    %1094 = vmatprep.subr.mxu0 0.0
    %1095 = vmatpush1.xpose.msra.mxu0 %v1090
    %1096 = vmatprep.subr.mxu0 0.0
    %1097 = vmatpush1.xpose.msra.mxu0 %v1089
    %1098 = vmatprep.subr.mxu0 0.0
    %1099 = vmatpush1.xpose.msra.mxu0 %v1088
    %1100 = vmatprep.subr.mxu0 0.0
    %1101 = vmatpush1.xpose.msra.mxu0 %v1087
    %1102 = vmatprep.subr.mxu0 0.0
    %1103 = vmatpush1.xpose.msra.mxu0 %v1086
    %1104 = vmatprep.subr.mxu0 0.0
    %1105 = vmatpush1.xpose.msra.mxu0 %v1085
    %1106 = vmatprep.subr.mxu0 0.0
    %1107 = vmatpush1.xpose.msra.mxu0 %v1084
    %1108 = vmatprep.subr.mxu0 0.0
    %1109 = vmatpush1.xpose.msra.mxu0 %v1083
    %1110 = vmatprep.subr.mxu0 0.0
    %1111 = vmatpush1.xpose.msra.mxu0 %v1082
    %1112 = vmatprep.subr.mxu0 0.0
    %1113 = vmatpush1.xpose.msra.mxu0 %v1081
    %1114 = vmatprep.subr.mxu0 0.0
    %1115 = vmatpush1.xpose.msra.mxu0 %v1080
    %1116 = vmatprep.subr.mxu0 0.0
    %1117 = vmatpush1.xpose.msra.mxu0 %v1079
    %1118 = vmatprep.subr.mxu0 0.0
    %1119 = vmatpush1.xpose.msra.mxu0 %v1078
    %1120 = vmatprep.subr.mxu0 0.0
    %1121 = vmatpush1.xpose.msra.mxu0 %v1077
    %1122 = vmatprep.subr.mxu0 0.0
    %1123 = vmatpush1.xpose.msra.mxu0 %v1076
    %1124 = vmatprep.subr.mxu0 0.0
    %1125 = vmatpush2.xpose.msra.mxu0 0.0
    %1126 = vmatprep.subr.mxu0 0.0
    %1127 = vmatpush2.xpose.msra.mxu0 0.0
    %1128 = vmatprep.subr.mxu0 0.0
    %1129 = vmatpush2.xpose.msra.mxu0 0.0
    %1130 = vmatprep.subr.mxu0 0.0
    %1131 = vmatpush2.xpose.msra.mxu0 0.0
    %1132 = vmatprep.subr.mxu0 0.0
    %1133 = vmatpush2.xpose.msra.mxu0 0.0
    %1134 = vmatprep.subr.mxu0 0.0
    %1135 = vmatpush2.xpose.msra.mxu0 0.0
    %1136 = vmatprep.subr.mxu0 0.0
    %1137 = vmatpush2.xpose.msra.mxu0 0.0
    %1138 = vmatprep.subr.mxu0 0.0
    %1139 = vmatpush2.xpose.msra.mxu0 0.0
    %1140 = vmatprep.subr.mxu0 0.0
    %1141 = vmatpush2.xpose.msra.mxu0 0.0
    %1142 = vmatprep.subr.mxu0 0.0
    %1143 = vmatpush2.xpose.msra.mxu0 0.0
    %1144 = vmatprep.subr.mxu0 0.0
    %1145 = vmatpush2.xpose.msra.mxu0 0.0
    %1146 = vmatprep.subr.mxu0 0.0
    %1147 = vmatpush2.xpose.msra.mxu0 0.0
    %1148 = vmatprep.subr.mxu0 0.0
    %1149 = vmatpush2.xpose.msra.mxu0 0.0
    %1150 = vmatprep.subr.mxu0 0.0
    %1151 = vmatpush2.xpose.msra.mxu0 0.0
    %1152 = vmatprep.subr.mxu0 0.0
    %1153 = vmatpush2.xpose.msra.mxu0 0.0
    %1154 = vmatprep.subr.mxu0 0.0
    %1155 = vmatpush2.xpose.msra.mxu0 0.0
    %1156 = vmatprep.mubr.f32.mxu0 0.0
    %1157 = vmatmul.mubr.f32.gmra.mxu0 %v484
    %v1158 = vpop.f32.mrf.mxu0
    %v1159 = vadd.f32 0.0, %v1158
    %v1160 = vpop.f32.mrf.mxu0
    %1161 = vmatprep.mubr.f32.mxu0 0.0
    %1162 = vmatmul.mubr.f32.gmra.mxu0 %v489
    %v1163 = vpop.f32.mrf.mxu0
    %v1164 = vadd.f32 0.0, %v1163
    %v1165 = vpop.f32.mrf.mxu0
    %1166 = vmatprep.mubr.f32.mxu0 0.0
    %1167 = vmatmul.mubr.f32.gmra.mxu0 %v494
    %v1168 = vpop.f32.mrf.mxu0
    %v1169 = vadd.f32 0.0, %v1168
    %v1170 = vpop.f32.mrf.mxu0
    %1171 = vdwg.mxu0
    %v1172 = vsel %vm555, %v1159, 0.0
    %v1173 = vsel %vm556, %v1164, 0.0
    %v1174 = vsel %vm557, %v1169, 0.0
    %v1175 = vadd.f32 %v1172, %v1173
    %v1176 = vadd.f32 %v1175, %v1174
    %v1177 = vrot.slane %v1176, 4
    %v1178 = vadd.f32 %v1176, %v1177
    %v1179 = vrot.slane %v1178, 2
    %v1180 = vadd.f32 %v1178, %v1179
    %v1181 = vrot.slane %v1180, 1
    %v1182 = vadd.f32 %v1180, %v1181
    %v1183 = vadd.f32 %v528, %v1182
    %v1184 = vadd.f32 %v530, %v1182
    %v1185 = vadd.f32 %v532, %v1182
    %v1186 = vmul.f32 %v1159, 2.0
    %v1187 = vmul.f32 %v1164, 2.0
    %v1188 = vmul.f32 %v1169, 2.0
    %v1189 = vsub.f32 %v1183, %v1186
    %v1190 = vsub.f32 %v1184, %v1187
    %v1191 = vsub.f32 %v1185, %v1188
    %v1192 = vmax.f32 %v1189, 0.0
    %v1193 = vmax.f32 %v1190, 0.0
    %v1194 = vmax.f32 %v1191, 0.0
    %v1195 = vadd.f32 %v1192, 1e-10
    %v1196 = vadd.f32 %v1193, 1e-10
    %v1197 = vadd.f32 %v1194, 1e-10
    %v1198 = vrcp.pop %v1195
    %v1199 = vrcp.pop %v1196
    %v1200 = vrcp.pop %v1197
    %v1201 = vmul.f32 %v1198, %v574
    %v1202 = vmul.f32 %v1199, %v575
    %v1203 = vmul.f32 %v1200, %v576
    %1204 = vmax.xlane.f32.xlu0 %v1201
    %v1205 = vpop.xlane.xlu0 %1204
    %1206 = vmax.xlane.f32.xlu0 %v1202
    %v1207 = vpop.xlane.xlu0 %1206
    %1208 = vmax.xlane.f32.xlu0 %v1203
    %v1209 = vpop.xlane.xlu0 %1208
    %v1210 = vrcp.pop %v1205
    %v1211 = vrcp.pop %v1207
    %v1212 = vrcp.pop %v1209
    %v1213 = vmul.f32 %v1201, %v1210
    %v1214 = vmul.f32 %v1202, %v1211
    %v1215 = vmul.f32 %v1203, %v1212
    %v1216 = vadd.f32 %v1213, %v561
    %v1217 = vadd.f32 %v1214, %v562
    %v1218 = vadd.f32 %v1215, %v563
    %v1219 = vmul.f32 %v1216, 0.99
    %v1220 = vmul.f32 %v1217, 0.99
    %v1221 = vmul.f32 %v1218, 0.99
    %s1222 = scalar_lea.vmem %s3, 72
    %v1223 = vld [vmem:[%s1222] sm:$0xff]
    %v1224 = vld [vmem:[%s1222 + $0x8] sm:$0xff]
    %v1225 = vld [vmem:[%s1222 + $0x10] sm:$0xff]
    %vm1226 = vcmp.ge.f32.partialorder %v1219, %v1223
    %vm1227 = vcmp.ge.f32.partialorder %v1220, %v1224
    %vm1228 = vcmp.ge.f32.partialorder %v1221, %v1225
    %v1229 = vsel %vm1226, 1, 0
    %v1230 = vsel %vm1227, 1, 0
    %v1231 = vsel %vm1228, 1, 0
    %v1232 = vcvt.s32.f32 %v1229
    %v1233 = vcvt.s32.f32 %v1230
    %v1234 = vcvt.s32.f32 %v1231
    %s1235 = scalar_lea.vmem [#allocation8], 72
    %1236 = vst [vmem:[%s1235] sm:$0xff] %v1232
    %1237 = vst [vmem:[%s1235 + $0x8] sm:$0xff] %v1233
    %1238 = vst [vmem:[%s1235 + $0x10] sm:$0xff] %v1234
    // Predicated region
    $region26: #{tpu_custom_call.1} parent=1 // pred_check
      _
    $region27: #{tpu_custom_call.1} parent=1 // pred_check_branch
      %1240 = sbr.rel (0) target = $region29
    $region28: #{tpu_custom_call.1} parent=1 // pred_region
      %s1242 = ssub.s32 1536, 1536
      %1243 = vsyncadd [#allocation5], %s1242
      %s1244 = sshll.u32 [#allocation8], 4
      %s1245 = int_to_ptr.vmem [resolvable:$true] %s1244
      %1250 = dma.vmem_to_hbm [thread:$0]  %s1245, 1536, %s4, [#allocation5], 128, 128, 8
    $region29: #{tpu_custom_call.1} parent=1 // pred_fallthru
      _
    // Predicated region
    $region30: #{tpu_custom_call.1} parent=1 // pred_check
      _
    $region31: #{tpu_custom_call.1} parent=1 // pred_check_branch
      %1252 = sbr.rel (0) target = $region33
    $region32: #{tpu_custom_call.1} parent=1 // pred_region
      %1253 = dma.done [#allocation5], 1536
    $region33: #{tpu_custom_call.1} parent=1 // pred_fallthru
      _
    %1254 = vsyncpa [#allocation4], 1
    %1255 = vsyncpa [#allocation7], 1
    %1256 = vsyncpa [#allocation5], 1

</llo_original>
